<compile_context>
chip_gen: v7x
topology: tpu7x:2x2x1
jax: 0.10.0
libtpu: 0.0.40
codegen_flags: <defaults>
</compile_context>

<pallas_src>
import jax
import jax.numpy as jnp
from jax.experimental import pallas as pl
from jax.experimental.pallas import tpu as pltpu

IN_DIM = 1000
IN_PAD = 1024          # K zero-padded up to a multiple of 128 (lane alignment)
HID_DIM = 512
OUT_DIM = 1
MAX_TB = 1024          # max batch-tile rows; keeps per-step VMEM ~9 MiB


def _round_up(n, m):
    return (n + m - 1) // m * m


def _pick_batch_tile(B):
    """Smallest multiple-of-16 tile that covers B with ceil(B/MAX_TB) tiles."""
    num_tiles = -(-B // MAX_TB)                      # ceil
    tb = _round_up(-(-B // num_tiles), 16)           # <= MAX_TB since MAX_TB % 16 == 0
    b_pad = _round_up(B, tb)
    return tb, b_pad, b_pad // tb


def adversary_kernel(x_ref, w1_ref, b1_ref, w2_ref, b2_ref, o_ref):
    # Layer 1 on the MXU: bf16 inputs, f32 accumulation.
    h = jnp.dot(x_ref[...], w1_ref[...], preferred_element_type=jnp.float32)
    h = jnp.maximum(h + b1_ref[...], 0.0)                   # bias + ReLU on the VPU (f32)
    # Layer 2 (out_features == 1): a 1-column MXU matmul would waste the array and
    # serialize behind layer 1, so do it on the VPU/XLU instead: elementwise
    # multiply by the w2 row, reduce over lanes, add the SMEM scalar b2.
    y = jnp.sum(h * w2_ref[...], axis=-1, keepdims=True)    # (TB, 1) f32
    o_ref[...] = (y + b2_ref[0, 0]).astype(o_ref.dtype)


def adversary_forward(x, w1, b1, w2, b2):
    """x: [B, 1000] f32 -> [B, 1] f32 (matches Adversary.forward)."""
    B = x.shape[0]
    tb, b_pad, num_tiles = _pick_batch_tile(B)

    # bf16 inputs for the MXU; zero-pad batch B -> b_pad and K 1000 -> 1024.
    # Zero padding preserves the dot product exactly; pad rows are sliced off.
    x_p = jnp.zeros((b_pad, IN_PAD), jnp.bfloat16)
    x_p = x_p.at[:B, :IN_DIM].set(x.astype(jnp.bfloat16))
    w1_p = jnp.zeros((IN_PAD, HID_DIM), jnp.bfloat16)
    w1_p = w1_p.at[:IN_DIM, :].set(w1.astype(jnp.bfloat16))

    b1_2d = b1.reshape(1, HID_DIM).astype(jnp.float32)
    w2_row = w2.reshape(1, HID_DIM).astype(jnp.float32)     # (512,1) -> (1,512)
    b2_2d = b2.reshape(1, 1).astype(jnp.float32)

    out_padded = pl.pallas_call(
        adversary_kernel,
        out_shape=jax.ShapeDtypeStruct((b_pad, OUT_DIM), jnp.float32),
        grid_spec=pltpu.PrefetchScalarGridSpec(
            num_scalar_prefetch=0,
            grid=(num_tiles,),
            in_specs=[
                pl.BlockSpec((tb, IN_PAD), lambda i: (i, 0)),        # x: pipelined per batch tile
                pl.BlockSpec((IN_PAD, HID_DIM), lambda i: (0, 0)),   # W1: resident, fetched once
                pl.BlockSpec((1, HID_DIM), lambda i: (0, 0)),        # b1: resident
                pl.BlockSpec((1, HID_DIM), lambda i: (0, 0)),        # w2 row: resident
                pl.BlockSpec(memory_space=pltpu.MemorySpace.SMEM),   # b2: scalar in SMEM
            ],
            out_specs=pl.BlockSpec((tb, OUT_DIM), lambda i: (i, 0)),
        ),
        compiler_params=pltpu.CompilerParams(
            dimension_semantics=("parallel",),   # batch tiles are independent (v7x: 2 TCs)
        ),
    )(x_p, w1_p, b1_2d, w2_row, b2_2d)

    return out_padded[:B]


def init_params(key):
    """Deterministic init mimicking nn.Linear's U(-1/sqrt(fan_in), 1/sqrt(fan_in))."""
    k1, k2, k3, k4 = jax.random.split(key, 4)
    bound1 = 1.0 / jnp.sqrt(jnp.float32(IN_DIM))
    bound2 = 1.0 / jnp.sqrt(jnp.float32(HID_DIM))
    # stored as [in, out] (already transposed relative to torch's [out, in])
    w1 = jax.random.uniform(k1, (IN_DIM, HID_DIM), jnp.float32, -bound1, bound1)
    b1 = jax.random.uniform(k2, (HID_DIM,), jnp.float32, -bound1, bound1)
    w2 = jax.random.uniform(k3, (HID_DIM, OUT_DIM), jnp.float32, -bound2, bound2)
    b2 = jax.random.uniform(k4, (OUT_DIM,), jnp.float32, -bound2, bound2)
    return w1, b1, w2, b2


if __name__ == "__main__":
    key = jax.random.PRNGKey(0)
    kx, kp = jax.random.split(key)

    B = 8  # small batch
    x = jax.random.normal(kx, (B, IN_DIM), jnp.float32)
    w1, b1, w2, b2 = init_params(kp)

    out = adversary_forward(x, w1, b1, w2, b2)
    out = jax.block_until_ready(out)
    assert out.shape == (B, OUT_DIM)

    # Reference 1: same math with the same bf16-quantized x/W1 (f32 accumulation)
    # -> validates the kernel up to accumulation-order noise.
    xq = x.astype(jnp.bfloat16).astype(jnp.float32)
    w1q = w1.astype(jnp.bfloat16).astype(jnp.float32)
    ref_q = jnp.maximum(xq @ w1q + b1, 0.0) @ w2 + b2
    assert jnp.allclose(out, ref_q, atol=2e-3, rtol=2e-3)

    # Reference 2: full-f32 PyTorch-equivalent forward (loose tolerance because
    # the kernel uses bf16 inputs for x/W1).
    ref_f32 = jnp.maximum(x @ w1 + b1, 0.0) @ w2 + b2
    assert jnp.allclose(out, ref_f32, atol=3e-2, rtol=3e-2)

    print("KERNEL_OK")
</pallas_src>

<mosaic_0001>
module attributes {stable_mosaic.version = 11 : i64} {
  func.func @adversary_kernel(%arg0: i32, %arg1: memref<16x1024xbf16, #tpu.memory_space<vmem>>, %arg2: memref<1024x512xbf16, #tpu.memory_space<vmem>>, %arg3: memref<1x512xf32, #tpu.memory_space<vmem>>, %arg4: memref<1x512xf32, #tpu.memory_space<vmem>>, %arg5: memref<1x1xf32, #tpu.memory_space<smem>>, %arg6: memref<16x1xf32, #tpu.memory_space<vmem>>) attributes {dimension_semantics = [#tpu.dimension_semantics<parallel>], iteration_bounds = array<i64: 1>, scalar_prefetch = 0 : i64, scratch_operands = 0 : i64, tpu.core_type = #tpu.core_type<tc>, window_params = [{transform_indices = @transform_0, window_bounds = array<i64: 16, 1024>}, {pipeline_mode = #tpu.pipeline_mode<synchronous>, transform_indices = @transform_1, window_bounds = array<i64: 1024, 512>}, {pipeline_mode = #tpu.pipeline_mode<synchronous>, transform_indices = @transform_2, window_bounds = array<i64: 1, 512>}, {pipeline_mode = #tpu.pipeline_mode<synchronous>, transform_indices = @transform_3, window_bounds = array<i64: 1, 512>}, {transform_indices = @transform_4, window_bounds = array<i64: 1, 1>}, {transform_indices = @transform_5, window_bounds = array<i64: 16, 1>}]} {
    %c0 = arith.constant 0 : index
    %c0_0 = arith.constant 0 : index
    %0 = vector.load %arg1[%c0, %c0_0] : memref<16x1024xbf16, #tpu.memory_space<vmem>>, vector<16x1024xbf16>
    %c0_1 = arith.constant 0 : index
    %c0_2 = arith.constant 0 : index
    %1 = vector.load %arg2[%c0_1, %c0_2] : memref<1024x512xbf16, #tpu.memory_space<vmem>>, vector<1024x512xbf16>
    %cst = arith.constant dense<0.000000e+00> : vector<16x512xf32>
    %2 = tpu.matmul %0, %1, %cst {dimension_numbers = #tpu.dot_dimension_numbers<[1], [0], [0], [1], [0, 0, 1, 1], [], []>} : vector<16x1024xbf16>, vector<1024x512xbf16>, vector<16x512xf32> -> vector<16x512xf32>
    %c0_3 = arith.constant 0 : index
    %c0_4 = arith.constant 0 : index
    %3 = vector.load %arg3[%c0_3, %c0_4] : memref<1x512xf32, #tpu.memory_space<vmem>>, vector<1x512xf32>
    %4 = vector.broadcast %3 : vector<1x512xf32> to vector<16x512xf32>
    %5 = arith.addf %2, %4 : vector<16x512xf32>
    %cst_5 = arith.constant 0.000000e+00 : f32
    %6 = vector.broadcast %cst_5 : f32 to vector<16x512xf32>
    %7 = arith.maximumf %5, %6 : vector<16x512xf32>
    %c0_6 = arith.constant 0 : index
    %c0_7 = arith.constant 0 : index
    %8 = vector.load %arg4[%c0_6, %c0_7] : memref<1x512xf32, #tpu.memory_space<vmem>>, vector<1x512xf32>
    %9 = vector.broadcast %8 : vector<1x512xf32> to vector<16x512xf32>
    %10 = arith.mulf %7, %9 : vector<16x512xf32>
    %cst_8 = arith.constant dense<0.000000e+00> : vector<16xf32>
    %11 = vector.multi_reduction <add>, %10, %cst_8 [1] : vector<16x512xf32> to vector<16xf32>
    %12 = vector.shape_cast %11 : vector<16xf32> to vector<16x1xf32>
    %c0_9 = arith.constant 0 : index
    %c0_10 = arith.constant 0 : index
    %13 = memref.load %arg5[%c0_9, %c0_10] : memref<1x1xf32, #tpu.memory_space<smem>>
    %14 = vector.broadcast %13 : f32 to vector<16x1xf32>
    %15 = arith.addf %12, %14 : vector<16x1xf32>
    %c0_11 = arith.constant 0 : index
    %c0_12 = arith.constant 0 : index
    %16 = vector.load %arg6[%c0_11, %c0_12] : memref<16x1xf32, #tpu.memory_space<vmem>>, vector<16x1xf32>
    tpu.vector_store %arg6[%c0_11, %c0_12], %15 {strides = array<i32>} : memref<16x1xf32, #tpu.memory_space<vmem>>, vector<16x1xf32>,
    return
  }
  func.func @transform_0(%arg0: i32) -> (i32, i32) {
    %c0_i32 = arith.constant 0 : i32
    %c0_i32_0 = arith.constant 0 : i32
    return %arg0, %c0_i32 : i32, i32
  }
  func.func @transform_1(%arg0: i32) -> (i32, i32) {
    %c0_i32 = arith.constant 0 : i32
    %c0_i32_0 = arith.constant 0 : i32
    %c0_i32_1 = arith.constant 0 : i32
    return %c0_i32, %c0_i32_0 : i32, i32
  }
  func.func @transform_2(%arg0: i32) -> (i32, i32) {
    %c0_i32 = arith.constant 0 : i32
    %c0_i32_0 = arith.constant 0 : i32
    %c0_i32_1 = arith.constant 0 : i32
    return %c0_i32, %c0_i32_0 : i32, i32
  }
  func.func @transform_3(%arg0: i32) -> (i32, i32) {
    %c0_i32 = arith.constant 0 : i32
    %c0_i32_0 = arith.constant 0 : i32
    %c0_i32_1 = arith.constant 0 : i32
    return %c0_i32, %c0_i32_0 : i32, i32
  }
  func.func @transform_4(%arg0: i32) -> (i32, i32) {
    %c0_i32 = arith.constant 0 : i32
    %c0_i32_0 = arith.constant 0 : i32
    %c0_i32_1 = arith.constant 0 : i32
    return %c0_i32, %c0_i32_0 : i32, i32
  }
  func.func @transform_5(%arg0: i32) -> (i32, i32) {
    %c0_i32 = arith.constant 0 : i32
    %c0_i32_0 = arith.constant 0 : i32
    return %arg0, %c0_i32 : i32, i32
  }
}

</mosaic_0001>

<llo_original>
// kernel: tpu_custom_call.1
$region0: #{tpu_custom_call.1}
  #allocation0 [shape = 'u32[]', space=smem, size = 0x4, offset = 0x4, fixed_abs, tag = 'smem constant byte address 0x4 - core index']
  #allocation1 [shape = 'u32[144,128]{1,0:T(1,128)}', space=vmem, size = 0x12000, scoped, tag = 'internal scratch']
  #allocation2 [shape = 'f32[1,1]{1,0:T(1,128)S(6)}', space=smem, size = 0x200, scoped, tag = 'scoped memory for tpu_custom_call.1']
  %s0 = inlined_call_operand.hbm [shape: bf16[16,1024], index: 0, kind: input, shape index: {}]
  %s1 = inlined_call_operand.hbm [shape: bf16[1024,512], index: 1, kind: input, shape index: {}]
  %s2 = inlined_call_operand.vmem [shape: f32[1,512], index: 2, kind: input, shape index: {}]
  %s3 = inlined_call_operand.vmem [shape: f32[1,512], index: 3, kind: input, shape index: {}]
  %s4 = inlined_call_operand.<no memory space> [shape: f32[1,1], index: 4, kind: input, shape index: {}]
  %s5 = inlined_call_operand.vmem [shape: f32[16,1], index: 5, kind: output, shape index: {}]
  %s6 = sld [smem:[#allocation0]]
  $region38: #{tpu_custom_call.1} parent=0
    _
  %s8 = ssub.s32 1, %s6
  %s9 = scalar_select 0, %s8, %s6
  %10 = sst [smem:[#allocation2]] %s4
  $region1: #{tpu_custom_call.1} parent=0
    #allocation3 [shape = 'u8[32768]{0}', space=vmem, size = 0x8000, scoped, tag = 'input window, operand 0, single buffered']
    #allocation4 [shape = 's32[1]{0}', space=sflag, size = 0x4, scoped, tag = 'scoped memory for tpu_custom_call.1']
    #allocation5 [shape = 'u8[1048576]{0}', space=vmem, size = 0x100000, scoped, tag = 'input window, operand 1, single buffered']
    #allocation6 [shape = 's32[1]{0}', space=sflag, size = 0x4, scoped, tag = 'scoped memory for tpu_custom_call.1']
    %11 = vsyncpa [#allocation4], 0
    %12 = vsyncpa [#allocation6], 0
    // Predicated region
    $region2: #{tpu_custom_call.1} parent=1 // pred_check
      _
    $region3: #{tpu_custom_call.1} parent=1 // pred_check_branch
      %14 = sbr.rel (0) target = $region5
    $region4: #{tpu_custom_call.1} parent=1 // pred_region
      %s16 = ssub.s32 1024, 1024
      %17 = vsyncadd [#allocation4], %s16
      %s18 = sshll.u32 [#allocation3], 4
      %s19 = int_to_ptr.vmem [resolvable:$true] %s18
      %24 = dma.hbm_to_vmem [thread:$0]  %s0, 1024, %s19, [#allocation4], 512, 512, 32
    $region5: #{tpu_custom_call.1} parent=1 // pred_fallthru
      _
    // Predicated region
    $region6: #{tpu_custom_call.1} parent=1 // pred_check
      _
    $region7: #{tpu_custom_call.1} parent=1 // pred_check_branch
      %26 = sbr.rel (0) target = $region9
    $region8: #{tpu_custom_call.1} parent=1 // pred_region
      %s28 = ssub.s32 32768, 32768
      %29 = vsyncadd [#allocation6], %s28
      %s30 = sshll.u32 [#allocation5], 4
      %s31 = int_to_ptr.vmem [resolvable:$true] %s30
      %36 = dma.hbm_to_vmem [thread:$0]  %s1, 32768, %s31, [#allocation6], 256, 256, 16
    $region9: #{tpu_custom_call.1} parent=1 // pred_fallthru
      _
    // Predicated region
    $region10: #{tpu_custom_call.1} parent=1 // pred_check
      _
    $region11: #{tpu_custom_call.1} parent=1 // pred_check_branch
      %38 = sbr.rel (0) target = $region13
    $region12: #{tpu_custom_call.1} parent=1 // pred_region
      _
    $region13: #{tpu_custom_call.1} parent=1 // pred_fallthru
      _
    // Predicated region
    $region14: #{tpu_custom_call.1} parent=1 // pred_check
      _
    $region15: #{tpu_custom_call.1} parent=1 // pred_check_branch
      %40 = sbr.rel (0) target = $region17
    $region16: #{tpu_custom_call.1} parent=1 // pred_region
      _
    $region17: #{tpu_custom_call.1} parent=1 // pred_fallthru
      _
    // Predicated region
    $region18: #{tpu_custom_call.1} parent=1 // pred_check
      _
    $region19: #{tpu_custom_call.1} parent=1 // pred_check_branch
      %42 = sbr.rel (0) target = $region21
    $region20: #{tpu_custom_call.1} parent=1 // pred_region
      _
    $region21: #{tpu_custom_call.1} parent=1 // pred_fallthru
      _
    // Predicated region
    $region22: #{tpu_custom_call.1} parent=1 // pred_check
      _
    $region23: #{tpu_custom_call.1} parent=1 // pred_check_branch
      %44 = sbr.rel (0) target = $region25
    $region24: #{tpu_custom_call.1} parent=1 // pred_region
      %45 = dma.done [#allocation4], 1024
    $region25: #{tpu_custom_call.1} parent=1 // pred_fallthru
      _
    // Predicated region
    $region26: #{tpu_custom_call.1} parent=1 // pred_check
      _
    $region27: #{tpu_custom_call.1} parent=1 // pred_check_branch
      %47 = sbr.rel (0) target = $region29
    $region28: #{tpu_custom_call.1} parent=1 // pred_region
      %48 = dma.done [#allocation6], 32768
    $region29: #{tpu_custom_call.1} parent=1 // pred_fallthru
      _
    %v49 = vld [vmem:[#allocation3] sm:$0xff]
    %v50 = vld [vmem:[#allocation3 + $0x8] sm:$0xff]
    %v51 = vld [vmem:[#allocation3 + $0x10] sm:$0xff]
    %v52 = vld [vmem:[#allocation3 + $0x18] sm:$0xff]
    %v53 = vld [vmem:[#allocation3 + $0x20] sm:$0xff]
    %v54 = vld [vmem:[#allocation3 + $0x28] sm:$0xff]
    %v55 = vld [vmem:[#allocation3 + $0x30] sm:$0xff]
    %v56 = vld [vmem:[#allocation3 + $0x38] sm:$0xff]
    %v57 = vld [vmem:[#allocation5] sm:$0xff]
    %v58 = vld [vmem:[#allocation5 + $0x8] sm:$0xff]
    %v59 = vld [vmem:[#allocation5 + $0x10] sm:$0xff]
    %v60 = vld [vmem:[#allocation5 + $0x18] sm:$0xff]
    %v61 = vld [vmem:[#allocation5 + $0x20] sm:$0xff]
    %v62 = vld [vmem:[#allocation5 + $0x28] sm:$0xff]
    %v63 = vld [vmem:[#allocation5 + $0x30] sm:$0xff]
    %v64 = vld [vmem:[#allocation5 + $0x38] sm:$0xff]
    %v65 = vld [vmem:[#allocation5 + $0x40] sm:$0xff]
    %v66 = vld [vmem:[#allocation5 + $0x48] sm:$0xff]
    %v67 = vld [vmem:[#allocation5 + $0x50] sm:$0xff]
    %v68 = vld [vmem:[#allocation5 + $0x58] sm:$0xff]
    %v69 = vld [vmem:[#allocation5 + $0x60] sm:$0xff]
    %v70 = vld [vmem:[#allocation5 + $0x68] sm:$0xff]
    %v71 = vld [vmem:[#allocation5 + $0x70] sm:$0xff]
    %v72 = vld [vmem:[#allocation5 + $0x78] sm:$0xff]
    %v73 = vld [vmem:[#allocation5 + $0x80] sm:$0xff]
    %v74 = vld [vmem:[#allocation5 + $0x88] sm:$0xff]
    %v75 = vld [vmem:[#allocation5 + $0x90] sm:$0xff]
    %v76 = vld [vmem:[#allocation5 + $0x98] sm:$0xff]
    %v77 = vld [vmem:[#allocation5 + $0xa0] sm:$0xff]
    %v78 = vld [vmem:[#allocation5 + $0xa8] sm:$0xff]
    %v79 = vld [vmem:[#allocation5 + $0xb0] sm:$0xff]
    %v80 = vld [vmem:[#allocation5 + $0xb8] sm:$0xff]
    %v81 = vld [vmem:[#allocation5 + $0xc0] sm:$0xff]
    %v82 = vld [vmem:[#allocation5 + $0xc8] sm:$0xff]
    %v83 = vld [vmem:[#allocation5 + $0xd0] sm:$0xff]
    %v84 = vld [vmem:[#allocation5 + $0xd8] sm:$0xff]
    %v85 = vld [vmem:[#allocation5 + $0xe0] sm:$0xff]
    %v86 = vld [vmem:[#allocation5 + $0xe8] sm:$0xff]
    %v87 = vld [vmem:[#allocation5 + $0xf0] sm:$0xff]
    %v88 = vld [vmem:[#allocation5 + $0xf8] sm:$0xff]
    %v89 = vld [vmem:[#allocation5 + $0x100] sm:$0xff]
    %v90 = vld [vmem:[#allocation5 + $0x108] sm:$0xff]
    %v91 = vld [vmem:[#allocation5 + $0x110] sm:$0xff]
    %v92 = vld [vmem:[#allocation5 + $0x118] sm:$0xff]
    %v93 = vld [vmem:[#allocation5 + $0x120] sm:$0xff]
    %v94 = vld [vmem:[#allocation5 + $0x128] sm:$0xff]
    %v95 = vld [vmem:[#allocation5 + $0x130] sm:$0xff]
    %v96 = vld [vmem:[#allocation5 + $0x138] sm:$0xff]
    %v97 = vld [vmem:[#allocation5 + $0x140] sm:$0xff]
    %v98 = vld [vmem:[#allocation5 + $0x148] sm:$0xff]
    %v99 = vld [vmem:[#allocation5 + $0x150] sm:$0xff]
    %v100 = vld [vmem:[#allocation5 + $0x158] sm:$0xff]
    %v101 = vld [vmem:[#allocation5 + $0x160] sm:$0xff]
    %v102 = vld [vmem:[#allocation5 + $0x168] sm:$0xff]
    %v103 = vld [vmem:[#allocation5 + $0x170] sm:$0xff]
    %v104 = vld [vmem:[#allocation5 + $0x178] sm:$0xff]
    %v105 = vld [vmem:[#allocation5 + $0x180] sm:$0xff]
    %v106 = vld [vmem:[#allocation5 + $0x188] sm:$0xff]
    %v107 = vld [vmem:[#allocation5 + $0x190] sm:$0xff]
    %v108 = vld [vmem:[#allocation5 + $0x198] sm:$0xff]
    %v109 = vld [vmem:[#allocation5 + $0x1a0] sm:$0xff]
    %v110 = vld [vmem:[#allocation5 + $0x1a8] sm:$0xff]
    %v111 = vld [vmem:[#allocation5 + $0x1b0] sm:$0xff]
    %v112 = vld [vmem:[#allocation5 + $0x1b8] sm:$0xff]
    %v113 = vld [vmem:[#allocation5 + $0x1c0] sm:$0xff]
    %v114 = vld [vmem:[#allocation5 + $0x1c8] sm:$0xff]
    %v115 = vld [vmem:[#allocation5 + $0x1d0] sm:$0xff]
    %v116 = vld [vmem:[#allocation5 + $0x1d8] sm:$0xff]
    %v117 = vld [vmem:[#allocation5 + $0x1e0] sm:$0xff]
    %v118 = vld [vmem:[#allocation5 + $0x1e8] sm:$0xff]
    %v119 = vld [vmem:[#allocation5 + $0x1f0] sm:$0xff]
    %v120 = vld [vmem:[#allocation5 + $0x1f8] sm:$0xff]
    %v121 = vld [vmem:[#allocation5 + $0x200] sm:$0xff]
    %v122 = vld [vmem:[#allocation5 + $0x208] sm:$0xff]
    %v123 = vld [vmem:[#allocation5 + $0x210] sm:$0xff]
    %v124 = vld [vmem:[#allocation5 + $0x218] sm:$0xff]
    %v125 = vld [vmem:[#allocation5 + $0x220] sm:$0xff]
    %v126 = vld [vmem:[#allocation5 + $0x228] sm:$0xff]
    %v127 = vld [vmem:[#allocation5 + $0x230] sm:$0xff]
    %v128 = vld [vmem:[#allocation5 + $0x238] sm:$0xff]
    %v129 = vld [vmem:[#allocation5 + $0x240] sm:$0xff]
    %v130 = vld [vmem:[#allocation5 + $0x248] sm:$0xff]
    %v131 = vld [vmem:[#allocation5 + $0x250] sm:$0xff]
    %v132 = vld [vmem:[#allocation5 + $0x258] sm:$0xff]
    %v133 = vld [vmem:[#allocation5 + $0x260] sm:$0xff]
    %v134 = vld [vmem:[#allocation5 + $0x268] sm:$0xff]
    %v135 = vld [vmem:[#allocation5 + $0x270] sm:$0xff]
    %v136 = vld [vmem:[#allocation5 + $0x278] sm:$0xff]
    %v137 = vld [vmem:[#allocation5 + $0x280] sm:$0xff]
    %v138 = vld [vmem:[#allocation5 + $0x288] sm:$0xff]
    %v139 = vld [vmem:[#allocation5 + $0x290] sm:$0xff]
    %v140 = vld [vmem:[#allocation5 + $0x298] sm:$0xff]
    %v141 = vld [vmem:[#allocation5 + $0x2a0] sm:$0xff]
    %v142 = vld [vmem:[#allocation5 + $0x2a8] sm:$0xff]
    %v143 = vld [vmem:[#allocation5 + $0x2b0] sm:$0xff]
    %v144 = vld [vmem:[#allocation5 + $0x2b8] sm:$0xff]
    %v145 = vld [vmem:[#allocation5 + $0x2c0] sm:$0xff]
    %v146 = vld [vmem:[#allocation5 + $0x2c8] sm:$0xff]
    %v147 = vld [vmem:[#allocation5 + $0x2d0] sm:$0xff]
    %v148 = vld [vmem:[#allocation5 + $0x2d8] sm:$0xff]
    %v149 = vld [vmem:[#allocation5 + $0x2e0] sm:$0xff]
    %v150 = vld [vmem:[#allocation5 + $0x2e8] sm:$0xff]
    %v151 = vld [vmem:[#allocation5 + $0x2f0] sm:$0xff]
    %v152 = vld [vmem:[#allocation5 + $0x2f8] sm:$0xff]
    %v153 = vld [vmem:[#allocation5 + $0x300] sm:$0xff]
    %v154 = vld [vmem:[#allocation5 + $0x308] sm:$0xff]
    %v155 = vld [vmem:[#allocation5 + $0x310] sm:$0xff]
    %v156 = vld [vmem:[#allocation5 + $0x318] sm:$0xff]
    %v157 = vld [vmem:[#allocation5 + $0x320] sm:$0xff]
    %v158 = vld [vmem:[#allocation5 + $0x328] sm:$0xff]
    %v159 = vld [vmem:[#allocation5 + $0x330] sm:$0xff]
    %v160 = vld [vmem:[#allocation5 + $0x338] sm:$0xff]
    %v161 = vld [vmem:[#allocation5 + $0x340] sm:$0xff]
    %v162 = vld [vmem:[#allocation5 + $0x348] sm:$0xff]
    %v163 = vld [vmem:[#allocation5 + $0x350] sm:$0xff]
    %v164 = vld [vmem:[#allocation5 + $0x358] sm:$0xff]
    %v165 = vld [vmem:[#allocation5 + $0x360] sm:$0xff]
    %v166 = vld [vmem:[#allocation5 + $0x368] sm:$0xff]
    %v167 = vld [vmem:[#allocation5 + $0x370] sm:$0xff]
    %v168 = vld [vmem:[#allocation5 + $0x378] sm:$0xff]
    %v169 = vld [vmem:[#allocation5 + $0x380] sm:$0xff]
    %v170 = vld [vmem:[#allocation5 + $0x388] sm:$0xff]
    %v171 = vld [vmem:[#allocation5 + $0x390] sm:$0xff]
    %v172 = vld [vmem:[#allocation5 + $0x398] sm:$0xff]
    %v173 = vld [vmem:[#allocation5 + $0x3a0] sm:$0xff]
    %v174 = vld [vmem:[#allocation5 + $0x3a8] sm:$0xff]
    %v175 = vld [vmem:[#allocation5 + $0x3b0] sm:$0xff]
    %v176 = vld [vmem:[#allocation5 + $0x3b8] sm:$0xff]
    %v177 = vld [vmem:[#allocation5 + $0x3c0] sm:$0xff]
    %v178 = vld [vmem:[#allocation5 + $0x3c8] sm:$0xff]
    %v179 = vld [vmem:[#allocation5 + $0x3d0] sm:$0xff]
    %v180 = vld [vmem:[#allocation5 + $0x3d8] sm:$0xff]
    %v181 = vld [vmem:[#allocation5 + $0x3e0] sm:$0xff]
    %v182 = vld [vmem:[#allocation5 + $0x3e8] sm:$0xff]
    %v183 = vld [vmem:[#allocation5 + $0x3f0] sm:$0xff]
    %v184 = vld [vmem:[#allocation5 + $0x3f8] sm:$0xff]
    %v185 = vld [vmem:[#allocation5 + $0x400] sm:$0xff]
    %v186 = vld [vmem:[#allocation5 + $0x408] sm:$0xff]
    %v187 = vld [vmem:[#allocation5 + $0x410] sm:$0xff]
    %v188 = vld [vmem:[#allocation5 + $0x418] sm:$0xff]
    %v189 = vld [vmem:[#allocation5 + $0x420] sm:$0xff]
    %v190 = vld [vmem:[#allocation5 + $0x428] sm:$0xff]
    %v191 = vld [vmem:[#allocation5 + $0x430] sm:$0xff]
    %v192 = vld [vmem:[#allocation5 + $0x438] sm:$0xff]
    %v193 = vld [vmem:[#allocation5 + $0x440] sm:$0xff]
    %v194 = vld [vmem:[#allocation5 + $0x448] sm:$0xff]
    %v195 = vld [vmem:[#allocation5 + $0x450] sm:$0xff]
    %v196 = vld [vmem:[#allocation5 + $0x458] sm:$0xff]
    %v197 = vld [vmem:[#allocation5 + $0x460] sm:$0xff]
    %v198 = vld [vmem:[#allocation5 + $0x468] sm:$0xff]
    %v199 = vld [vmem:[#allocation5 + $0x470] sm:$0xff]
    %v200 = vld [vmem:[#allocation5 + $0x478] sm:$0xff]
    %v201 = vld [vmem:[#allocation5 + $0x480] sm:$0xff]
    %v202 = vld [vmem:[#allocation5 + $0x488] sm:$0xff]
    %v203 = vld [vmem:[#allocation5 + $0x490] sm:$0xff]
    %v204 = vld [vmem:[#allocation5 + $0x498] sm:$0xff]
    %v205 = vld [vmem:[#allocation5 + $0x4a0] sm:$0xff]
    %v206 = vld [vmem:[#allocation5 + $0x4a8] sm:$0xff]
    %v207 = vld [vmem:[#allocation5 + $0x4b0] sm:$0xff]
    %v208 = vld [vmem:[#allocation5 + $0x4b8] sm:$0xff]
    %v209 = vld [vmem:[#allocation5 + $0x4c0] sm:$0xff]
    %v210 = vld [vmem:[#allocation5 + $0x4c8] sm:$0xff]
    %v211 = vld [vmem:[#allocation5 + $0x4d0] sm:$0xff]
    %v212 = vld [vmem:[#allocation5 + $0x4d8] sm:$0xff]
    %v213 = vld [vmem:[#allocation5 + $0x4e0] sm:$0xff]
    %v214 = vld [vmem:[#allocation5 + $0x4e8] sm:$0xff]
    %v215 = vld [vmem:[#allocation5 + $0x4f0] sm:$0xff]
    %v216 = vld [vmem:[#allocation5 + $0x4f8] sm:$0xff]
    %v217 = vld [vmem:[#allocation5 + $0x500] sm:$0xff]
    %v218 = vld [vmem:[#allocation5 + $0x508] sm:$0xff]
    %v219 = vld [vmem:[#allocation5 + $0x510] sm:$0xff]
    %v220 = vld [vmem:[#allocation5 + $0x518] sm:$0xff]
    %v221 = vld [vmem:[#allocation5 + $0x520] sm:$0xff]
    %v222 = vld [vmem:[#allocation5 + $0x528] sm:$0xff]
    %v223 = vld [vmem:[#allocation5 + $0x530] sm:$0xff]
    %v224 = vld [vmem:[#allocation5 + $0x538] sm:$0xff]
    %v225 = vld [vmem:[#allocation5 + $0x540] sm:$0xff]
    %v226 = vld [vmem:[#allocation5 + $0x548] sm:$0xff]
    %v227 = vld [vmem:[#allocation5 + $0x550] sm:$0xff]
    %v228 = vld [vmem:[#allocation5 + $0x558] sm:$0xff]
    %v229 = vld [vmem:[#allocation5 + $0x560] sm:$0xff]
    %v230 = vld [vmem:[#allocation5 + $0x568] sm:$0xff]
    %v231 = vld [vmem:[#allocation5 + $0x570] sm:$0xff]
    %v232 = vld [vmem:[#allocation5 + $0x578] sm:$0xff]
    %v233 = vld [vmem:[#allocation5 + $0x580] sm:$0xff]
    %v234 = vld [vmem:[#allocation5 + $0x588] sm:$0xff]
    %v235 = vld [vmem:[#allocation5 + $0x590] sm:$0xff]
    %v236 = vld [vmem:[#allocation5 + $0x598] sm:$0xff]
    %v237 = vld [vmem:[#allocation5 + $0x5a0] sm:$0xff]
    %v238 = vld [vmem:[#allocation5 + $0x5a8] sm:$0xff]
    %v239 = vld [vmem:[#allocation5 + $0x5b0] sm:$0xff]
    %v240 = vld [vmem:[#allocation5 + $0x5b8] sm:$0xff]
    %v241 = vld [vmem:[#allocation5 + $0x5c0] sm:$0xff]
    %v242 = vld [vmem:[#allocation5 + $0x5c8] sm:$0xff]
    %v243 = vld [vmem:[#allocation5 + $0x5d0] sm:$0xff]
    %v244 = vld [vmem:[#allocation5 + $0x5d8] sm:$0xff]
    %v245 = vld [vmem:[#allocation5 + $0x5e0] sm:$0xff]
    %v246 = vld [vmem:[#allocation5 + $0x5e8] sm:$0xff]
    %v247 = vld [vmem:[#allocation5 + $0x5f0] sm:$0xff]
    %v248 = vld [vmem:[#allocation5 + $0x5f8] sm:$0xff]
    %v249 = vld [vmem:[#allocation5 + $0x600] sm:$0xff]
    %v250 = vld [vmem:[#allocation5 + $0x608] sm:$0xff]
    %v251 = vld [vmem:[#allocation5 + $0x610] sm:$0xff]
    %v252 = vld [vmem:[#allocation5 + $0x618] sm:$0xff]
    %v253 = vld [vmem:[#allocation5 + $0x620] sm:$0xff]
    %v254 = vld [vmem:[#allocation5 + $0x628] sm:$0xff]
    %v255 = vld [vmem:[#allocation5 + $0x630] sm:$0xff]
    %v256 = vld [vmem:[#allocation5 + $0x638] sm:$0xff]
    %v257 = vld [vmem:[#allocation5 + $0x640] sm:$0xff]
    %v258 = vld [vmem:[#allocation5 + $0x648] sm:$0xff]
    %v259 = vld [vmem:[#allocation5 + $0x650] sm:$0xff]
    %v260 = vld [vmem:[#allocation5 + $0x658] sm:$0xff]
    %v261 = vld [vmem:[#allocation5 + $0x660] sm:$0xff]
    %v262 = vld [vmem:[#allocation5 + $0x668] sm:$0xff]
    %v263 = vld [vmem:[#allocation5 + $0x670] sm:$0xff]
    %v264 = vld [vmem:[#allocation5 + $0x678] sm:$0xff]
    %v265 = vld [vmem:[#allocation5 + $0x680] sm:$0xff]
    %v266 = vld [vmem:[#allocation5 + $0x688] sm:$0xff]
    %v267 = vld [vmem:[#allocation5 + $0x690] sm:$0xff]
    %v268 = vld [vmem:[#allocation5 + $0x698] sm:$0xff]
    %v269 = vld [vmem:[#allocation5 + $0x6a0] sm:$0xff]
    %v270 = vld [vmem:[#allocation5 + $0x6a8] sm:$0xff]
    %v271 = vld [vmem:[#allocation5 + $0x6b0] sm:$0xff]
    %v272 = vld [vmem:[#allocation5 + $0x6b8] sm:$0xff]
    %v273 = vld [vmem:[#allocation5 + $0x6c0] sm:$0xff]
    %v274 = vld [vmem:[#allocation5 + $0x6c8] sm:$0xff]
    %v275 = vld [vmem:[#allocation5 + $0x6d0] sm:$0xff]
    %v276 = vld [vmem:[#allocation5 + $0x6d8] sm:$0xff]
    %v277 = vld [vmem:[#allocation5 + $0x6e0] sm:$0xff]
    %v278 = vld [vmem:[#allocation5 + $0x6e8] sm:$0xff]
    %v279 = vld [vmem:[#allocation5 + $0x6f0] sm:$0xff]
    %v280 = vld [vmem:[#allocation5 + $0x6f8] sm:$0xff]
    %v281 = vld [vmem:[#allocation5 + $0x700] sm:$0xff]
    %v282 = vld [vmem:[#allocation5 + $0x708] sm:$0xff]
    %v283 = vld [vmem:[#allocation5 + $0x710] sm:$0xff]
    %v284 = vld [vmem:[#allocation5 + $0x718] sm:$0xff]
    %v285 = vld [vmem:[#allocation5 + $0x720] sm:$0xff]
    %v286 = vld [vmem:[#allocation5 + $0x728] sm:$0xff]
    %v287 = vld [vmem:[#allocation5 + $0x730] sm:$0xff]
    %v288 = vld [vmem:[#allocation5 + $0x738] sm:$0xff]
    %v289 = vld [vmem:[#allocation5 + $0x740] sm:$0xff]
    %v290 = vld [vmem:[#allocation5 + $0x748] sm:$0xff]
    %v291 = vld [vmem:[#allocation5 + $0x750] sm:$0xff]
    %v292 = vld [vmem:[#allocation5 + $0x758] sm:$0xff]
    %v293 = vld [vmem:[#allocation5 + $0x760] sm:$0xff]
    %v294 = vld [vmem:[#allocation5 + $0x768] sm:$0xff]
    %v295 = vld [vmem:[#allocation5 + $0x770] sm:$0xff]
    %v296 = vld [vmem:[#allocation5 + $0x778] sm:$0xff]
    %v297 = vld [vmem:[#allocation5 + $0x780] sm:$0xff]
    %v298 = vld [vmem:[#allocation5 + $0x788] sm:$0xff]
    %v299 = vld [vmem:[#allocation5 + $0x790] sm:$0xff]
    %v300 = vld [vmem:[#allocation5 + $0x798] sm:$0xff]
    %v301 = vld [vmem:[#allocation5 + $0x7a0] sm:$0xff]
    %v302 = vld [vmem:[#allocation5 + $0x7a8] sm:$0xff]
    %v303 = vld [vmem:[#allocation5 + $0x7b0] sm:$0xff]
    %v304 = vld [vmem:[#allocation5 + $0x7b8] sm:$0xff]
    %v305 = vld [vmem:[#allocation5 + $0x7c0] sm:$0xff]
    %v306 = vld [vmem:[#allocation5 + $0x7c8] sm:$0xff]
    %v307 = vld [vmem:[#allocation5 + $0x7d0] sm:$0xff]
    %v308 = vld [vmem:[#allocation5 + $0x7d8] sm:$0xff]
    %v309 = vld [vmem:[#allocation5 + $0x7e0] sm:$0xff]
    %v310 = vld [vmem:[#allocation5 + $0x7e8] sm:$0xff]
    %v311 = vld [vmem:[#allocation5 + $0x7f0] sm:$0xff]
    %v312 = vld [vmem:[#allocation5 + $0x7f8] sm:$0xff]
    %v313 = vld [vmem:[%s2] sm:$0xf]
    %v315 = vlaneseq
    %v316 = vshrl.u32 %v315, 7
    %v317 = vsub.s32 0, %v316
    %v318 = vrot.slane %v313, %v317
    %v319 = vlaneseq
    %v320 = vshrl.u32 %v319, 7
    %v321 = vsub.s32 1, %v320
    %v322 = vrot.slane %v313, %v321
    %v323 = vlaneseq
    %v324 = vshrl.u32 %v323, 7
    %v325 = vsub.s32 2, %v324
    %v326 = vrot.slane %v313, %v325
    %v327 = vlaneseq
    %v328 = vshrl.u32 %v327, 7
    %v329 = vsub.s32 3, %v328
    %v330 = vrot.slane %v313, %v329
    %v343 = vunpack.c.l.b16 %v49
    %v344 = vunpack.c.h.b16 %v49
    %v345 = vunpack.c.l.b16 %v50
    %v346 = vunpack.c.h.b16 %v50
    %v347 = vunpack.c.l.b16 %v51
    %v348 = vunpack.c.h.b16 %v51
    %v349 = vunpack.c.l.b16 %v52
    %v350 = vunpack.c.h.b16 %v52
    %v351 = vunpack.c.l.b16 %v53
    %v352 = vunpack.c.h.b16 %v53
    %v353 = vunpack.c.l.b16 %v54
    %v354 = vunpack.c.h.b16 %v54
    %v355 = vunpack.c.l.b16 %v55
    %v356 = vunpack.c.h.b16 %v55
    %v357 = vunpack.c.l.b16 %v56
    %v358 = vunpack.c.h.b16 %v56
    %v359 = vpack.c.b16 %v351, %v343
    %v360 = vpack.c.b16 %v352, %v344
    %v361 = vpack.c.b16 %v353, %v345
    %v362 = vpack.c.b16 %v354, %v346
    %v363 = vpack.c.b16 %v355, %v347
    %v364 = vpack.c.b16 %v356, %v348
    %v365 = vpack.c.b16 %v357, %v349
    %v366 = vpack.c.b16 %v358, %v350
    %v631 = vunpack.c.l.b16 %v57
    %v632 = vunpack.c.h.b16 %v57
    %v633 = vunpack.c.l.b16 %v58
    %v634 = vunpack.c.h.b16 %v58
    %v635 = vunpack.c.l.b16 %v59
    %v636 = vunpack.c.h.b16 %v59
    %v637 = vunpack.c.l.b16 %v60
    %v638 = vunpack.c.h.b16 %v60
    %v639 = vunpack.c.l.b16 %v61
    %v640 = vunpack.c.h.b16 %v61
    %v641 = vunpack.c.l.b16 %v62
    %v642 = vunpack.c.h.b16 %v62
    %v643 = vunpack.c.l.b16 %v63
    %v644 = vunpack.c.h.b16 %v63
    %v645 = vunpack.c.l.b16 %v64
    %v646 = vunpack.c.h.b16 %v64
    %v647 = vunpack.c.l.b16 %v65
    %v648 = vunpack.c.h.b16 %v65
    %v649 = vunpack.c.l.b16 %v66
    %v650 = vunpack.c.h.b16 %v66
    %v651 = vunpack.c.l.b16 %v67
    %v652 = vunpack.c.h.b16 %v67
    %v653 = vunpack.c.l.b16 %v68
    %v654 = vunpack.c.h.b16 %v68
    %v655 = vunpack.c.l.b16 %v69
    %v656 = vunpack.c.h.b16 %v69
    %v657 = vunpack.c.l.b16 %v70
    %v658 = vunpack.c.h.b16 %v70
    %v659 = vunpack.c.l.b16 %v71
    %v660 = vunpack.c.h.b16 %v71
    %v661 = vunpack.c.l.b16 %v72
    %v662 = vunpack.c.h.b16 %v72
    %v663 = vunpack.c.l.b16 %v73
    %v664 = vunpack.c.h.b16 %v73
    %v665 = vunpack.c.l.b16 %v74
    %v666 = vunpack.c.h.b16 %v74
    %v667 = vunpack.c.l.b16 %v75
    %v668 = vunpack.c.h.b16 %v75
    %v669 = vunpack.c.l.b16 %v76
    %v670 = vunpack.c.h.b16 %v76
    %v671 = vunpack.c.l.b16 %v77
    %v672 = vunpack.c.h.b16 %v77
    %v673 = vunpack.c.l.b16 %v78
    %v674 = vunpack.c.h.b16 %v78
    %v675 = vunpack.c.l.b16 %v79
    %v676 = vunpack.c.h.b16 %v79
    %v677 = vunpack.c.l.b16 %v80
    %v678 = vunpack.c.h.b16 %v80
    %v679 = vunpack.c.l.b16 %v81
    %v680 = vunpack.c.h.b16 %v81
    %v681 = vunpack.c.l.b16 %v82
    %v682 = vunpack.c.h.b16 %v82
    %v683 = vunpack.c.l.b16 %v83
    %v684 = vunpack.c.h.b16 %v83
    %v685 = vunpack.c.l.b16 %v84
    %v686 = vunpack.c.h.b16 %v84
    %v687 = vunpack.c.l.b16 %v85
    %v688 = vunpack.c.h.b16 %v85
    %v689 = vunpack.c.l.b16 %v86
    %v690 = vunpack.c.h.b16 %v86
    %v691 = vunpack.c.l.b16 %v87
    %v692 = vunpack.c.h.b16 %v87
    %v693 = vunpack.c.l.b16 %v88
    %v694 = vunpack.c.h.b16 %v88
    %v695 = vunpack.c.l.b16 %v89
    %v696 = vunpack.c.h.b16 %v89
    %v697 = vunpack.c.l.b16 %v90
    %v698 = vunpack.c.h.b16 %v90
    %v699 = vunpack.c.l.b16 %v91
    %v700 = vunpack.c.h.b16 %v91
    %v701 = vunpack.c.l.b16 %v92
    %v702 = vunpack.c.h.b16 %v92
    %v703 = vunpack.c.l.b16 %v93
    %v704 = vunpack.c.h.b16 %v93
    %v705 = vunpack.c.l.b16 %v94
    %v706 = vunpack.c.h.b16 %v94
    %v707 = vunpack.c.l.b16 %v95
    %v708 = vunpack.c.h.b16 %v95
    %v709 = vunpack.c.l.b16 %v96
    %v710 = vunpack.c.h.b16 %v96
    %v711 = vunpack.c.l.b16 %v97
    %v712 = vunpack.c.h.b16 %v97
    %v713 = vunpack.c.l.b16 %v98
    %v714 = vunpack.c.h.b16 %v98
    %v715 = vunpack.c.l.b16 %v99
    %v716 = vunpack.c.h.b16 %v99
    %v717 = vunpack.c.l.b16 %v100
    %v718 = vunpack.c.h.b16 %v100
    %v719 = vunpack.c.l.b16 %v101
    %v720 = vunpack.c.h.b16 %v101
    %v721 = vunpack.c.l.b16 %v102
    %v722 = vunpack.c.h.b16 %v102
    %v723 = vunpack.c.l.b16 %v103
    %v724 = vunpack.c.h.b16 %v103
    %v725 = vunpack.c.l.b16 %v104
    %v726 = vunpack.c.h.b16 %v104
    %v727 = vunpack.c.l.b16 %v105
    %v728 = vunpack.c.h.b16 %v105
    %v729 = vunpack.c.l.b16 %v106
    %v730 = vunpack.c.h.b16 %v106
    %v731 = vunpack.c.l.b16 %v107
    %v732 = vunpack.c.h.b16 %v107
    %v733 = vunpack.c.l.b16 %v108
    %v734 = vunpack.c.h.b16 %v108
    %v735 = vunpack.c.l.b16 %v109
    %v736 = vunpack.c.h.b16 %v109
    %v737 = vunpack.c.l.b16 %v110
    %v738 = vunpack.c.h.b16 %v110
    %v739 = vunpack.c.l.b16 %v111
    %v740 = vunpack.c.h.b16 %v111
    %v741 = vunpack.c.l.b16 %v112
    %v742 = vunpack.c.h.b16 %v112
    %v743 = vunpack.c.l.b16 %v113
    %v744 = vunpack.c.h.b16 %v113
    %v745 = vunpack.c.l.b16 %v114
    %v746 = vunpack.c.h.b16 %v114
    %v747 = vunpack.c.l.b16 %v115
    %v748 = vunpack.c.h.b16 %v115
    %v749 = vunpack.c.l.b16 %v116
    %v750 = vunpack.c.h.b16 %v116
    %v751 = vunpack.c.l.b16 %v117
    %v752 = vunpack.c.h.b16 %v117
    %v753 = vunpack.c.l.b16 %v118
    %v754 = vunpack.c.h.b16 %v118
    %v755 = vunpack.c.l.b16 %v119
    %v756 = vunpack.c.h.b16 %v119
    %v757 = vunpack.c.l.b16 %v120
    %v758 = vunpack.c.h.b16 %v120
    %v759 = vunpack.c.l.b16 %v121
    %v760 = vunpack.c.h.b16 %v121
    %v761 = vunpack.c.l.b16 %v122
    %v762 = vunpack.c.h.b16 %v122
    %v763 = vunpack.c.l.b16 %v123
    %v764 = vunpack.c.h.b16 %v123
    %v765 = vunpack.c.l.b16 %v124
    %v766 = vunpack.c.h.b16 %v124
    %v767 = vunpack.c.l.b16 %v125
    %v768 = vunpack.c.h.b16 %v125
    %v769 = vunpack.c.l.b16 %v126
    %v770 = vunpack.c.h.b16 %v126
    %v771 = vunpack.c.l.b16 %v127
    %v772 = vunpack.c.h.b16 %v127
    %v773 = vunpack.c.l.b16 %v128
    %v774 = vunpack.c.h.b16 %v128
    %v775 = vunpack.c.l.b16 %v129
    %v776 = vunpack.c.h.b16 %v129
    %v777 = vunpack.c.l.b16 %v130
    %v778 = vunpack.c.h.b16 %v130
    %v779 = vunpack.c.l.b16 %v131
    %v780 = vunpack.c.h.b16 %v131
    %v781 = vunpack.c.l.b16 %v132
    %v782 = vunpack.c.h.b16 %v132
    %v783 = vunpack.c.l.b16 %v133
    %v784 = vunpack.c.h.b16 %v133
    %v785 = vunpack.c.l.b16 %v134
    %v786 = vunpack.c.h.b16 %v134
    %v787 = vunpack.c.l.b16 %v135
    %v788 = vunpack.c.h.b16 %v135
    %v789 = vunpack.c.l.b16 %v136
    %v790 = vunpack.c.h.b16 %v136
    %v791 = vunpack.c.l.b16 %v137
    %v792 = vunpack.c.h.b16 %v137
    %v793 = vunpack.c.l.b16 %v138
    %v794 = vunpack.c.h.b16 %v138
    %v795 = vunpack.c.l.b16 %v139
    %v796 = vunpack.c.h.b16 %v139
    %v797 = vunpack.c.l.b16 %v140
    %v798 = vunpack.c.h.b16 %v140
    %v799 = vunpack.c.l.b16 %v141
    %v800 = vunpack.c.h.b16 %v141
    %v801 = vunpack.c.l.b16 %v142
    %v802 = vunpack.c.h.b16 %v142
    %v803 = vunpack.c.l.b16 %v143
    %v804 = vunpack.c.h.b16 %v143
    %v805 = vunpack.c.l.b16 %v144
    %v806 = vunpack.c.h.b16 %v144
    %v807 = vunpack.c.l.b16 %v145
    %v808 = vunpack.c.h.b16 %v145
    %v809 = vunpack.c.l.b16 %v146
    %v810 = vunpack.c.h.b16 %v146
    %v811 = vunpack.c.l.b16 %v147
    %v812 = vunpack.c.h.b16 %v147
    %v813 = vunpack.c.l.b16 %v148
    %v814 = vunpack.c.h.b16 %v148
    %v815 = vunpack.c.l.b16 %v149
    %v816 = vunpack.c.h.b16 %v149
    %v817 = vunpack.c.l.b16 %v150
    %v818 = vunpack.c.h.b16 %v150
    %v819 = vunpack.c.l.b16 %v151
    %v820 = vunpack.c.h.b16 %v151
    %v821 = vunpack.c.l.b16 %v152
    %v822 = vunpack.c.h.b16 %v152
    %v823 = vunpack.c.l.b16 %v153
    %v824 = vunpack.c.h.b16 %v153
    %v825 = vunpack.c.l.b16 %v154
    %v826 = vunpack.c.h.b16 %v154
    %v827 = vunpack.c.l.b16 %v155
    %v828 = vunpack.c.h.b16 %v155
    %v829 = vunpack.c.l.b16 %v156
    %v830 = vunpack.c.h.b16 %v156
    %v831 = vunpack.c.l.b16 %v157
    %v832 = vunpack.c.h.b16 %v157
    %v833 = vunpack.c.l.b16 %v158
    %v834 = vunpack.c.h.b16 %v158
    %v835 = vunpack.c.l.b16 %v159
    %v836 = vunpack.c.h.b16 %v159
    %v837 = vunpack.c.l.b16 %v160
    %v838 = vunpack.c.h.b16 %v160
    %v839 = vunpack.c.l.b16 %v161
    %v840 = vunpack.c.h.b16 %v161
    %v841 = vunpack.c.l.b16 %v162
    %v842 = vunpack.c.h.b16 %v162
    %v843 = vunpack.c.l.b16 %v163
    %v844 = vunpack.c.h.b16 %v163
    %v845 = vunpack.c.l.b16 %v164
    %v846 = vunpack.c.h.b16 %v164
    %v847 = vunpack.c.l.b16 %v165
    %v848 = vunpack.c.h.b16 %v165
    %v849 = vunpack.c.l.b16 %v166
    %v850 = vunpack.c.h.b16 %v166
    %v851 = vunpack.c.l.b16 %v167
    %v852 = vunpack.c.h.b16 %v167
    %v853 = vunpack.c.l.b16 %v168
    %v854 = vunpack.c.h.b16 %v168
    %v855 = vunpack.c.l.b16 %v169
    %v856 = vunpack.c.h.b16 %v169
    %v857 = vunpack.c.l.b16 %v170
    %v858 = vunpack.c.h.b16 %v170
    %v859 = vunpack.c.l.b16 %v171
    %v860 = vunpack.c.h.b16 %v171
    %v861 = vunpack.c.l.b16 %v172
    %v862 = vunpack.c.h.b16 %v172
    %v863 = vunpack.c.l.b16 %v173
    %v864 = vunpack.c.h.b16 %v173
    %v865 = vunpack.c.l.b16 %v174
    %v866 = vunpack.c.h.b16 %v174
    %v867 = vunpack.c.l.b16 %v175
    %v868 = vunpack.c.h.b16 %v175
    %v869 = vunpack.c.l.b16 %v176
    %v870 = vunpack.c.h.b16 %v176
    %v871 = vunpack.c.l.b16 %v177
    %v872 = vunpack.c.h.b16 %v177
    %v873 = vunpack.c.l.b16 %v178
    %v874 = vunpack.c.h.b16 %v178
    %v875 = vunpack.c.l.b16 %v179
    %v876 = vunpack.c.h.b16 %v179
    %v877 = vunpack.c.l.b16 %v180
    %v878 = vunpack.c.h.b16 %v180
    %v879 = vunpack.c.l.b16 %v181
    %v880 = vunpack.c.h.b16 %v181
    %v881 = vunpack.c.l.b16 %v182
    %v882 = vunpack.c.h.b16 %v182
    %v883 = vunpack.c.l.b16 %v183
    %v884 = vunpack.c.h.b16 %v183
    %v885 = vunpack.c.l.b16 %v184
    %v886 = vunpack.c.h.b16 %v184
    %v887 = vunpack.c.l.b16 %v185
    %v888 = vunpack.c.h.b16 %v185
    %v889 = vunpack.c.l.b16 %v186
    %v890 = vunpack.c.h.b16 %v186
    %v891 = vunpack.c.l.b16 %v187
    %v892 = vunpack.c.h.b16 %v187
    %v893 = vunpack.c.l.b16 %v188
    %v894 = vunpack.c.h.b16 %v188
    %v895 = vunpack.c.l.b16 %v189
    %v896 = vunpack.c.h.b16 %v189
    %v897 = vunpack.c.l.b16 %v190
    %v898 = vunpack.c.h.b16 %v190
    %v899 = vunpack.c.l.b16 %v191
    %v900 = vunpack.c.h.b16 %v191
    %v901 = vunpack.c.l.b16 %v192
    %v902 = vunpack.c.h.b16 %v192
    %v903 = vunpack.c.l.b16 %v193
    %v904 = vunpack.c.h.b16 %v193
    %v905 = vunpack.c.l.b16 %v194
    %v906 = vunpack.c.h.b16 %v194
    %v907 = vunpack.c.l.b16 %v195
    %v908 = vunpack.c.h.b16 %v195
    %v909 = vunpack.c.l.b16 %v196
    %v910 = vunpack.c.h.b16 %v196
    %v911 = vunpack.c.l.b16 %v197
    %v912 = vunpack.c.h.b16 %v197
    %v913 = vunpack.c.l.b16 %v198
    %v914 = vunpack.c.h.b16 %v198
    %v915 = vunpack.c.l.b16 %v199
    %v916 = vunpack.c.h.b16 %v199
    %v917 = vunpack.c.l.b16 %v200
    %v918 = vunpack.c.h.b16 %v200
    %v919 = vunpack.c.l.b16 %v201
    %v920 = vunpack.c.h.b16 %v201
    %v921 = vunpack.c.l.b16 %v202
    %v922 = vunpack.c.h.b16 %v202
    %v923 = vunpack.c.l.b16 %v203
    %v924 = vunpack.c.h.b16 %v203
    %v925 = vunpack.c.l.b16 %v204
    %v926 = vunpack.c.h.b16 %v204
    %v927 = vunpack.c.l.b16 %v205
    %v928 = vunpack.c.h.b16 %v205
    %v929 = vunpack.c.l.b16 %v206
    %v930 = vunpack.c.h.b16 %v206
    %v931 = vunpack.c.l.b16 %v207
    %v932 = vunpack.c.h.b16 %v207
    %v933 = vunpack.c.l.b16 %v208
    %v934 = vunpack.c.h.b16 %v208
    %v935 = vunpack.c.l.b16 %v209
    %v936 = vunpack.c.h.b16 %v209
    %v937 = vunpack.c.l.b16 %v210
    %v938 = vunpack.c.h.b16 %v210
    %v939 = vunpack.c.l.b16 %v211
    %v940 = vunpack.c.h.b16 %v211
    %v941 = vunpack.c.l.b16 %v212
    %v942 = vunpack.c.h.b16 %v212
    %v943 = vunpack.c.l.b16 %v213
    %v944 = vunpack.c.h.b16 %v213
    %v945 = vunpack.c.l.b16 %v214
    %v946 = vunpack.c.h.b16 %v214
    %v947 = vunpack.c.l.b16 %v215
    %v948 = vunpack.c.h.b16 %v215
    %v949 = vunpack.c.l.b16 %v216
    %v950 = vunpack.c.h.b16 %v216
    %v951 = vunpack.c.l.b16 %v217
    %v952 = vunpack.c.h.b16 %v217
    %v953 = vunpack.c.l.b16 %v218
    %v954 = vunpack.c.h.b16 %v218
    %v955 = vunpack.c.l.b16 %v219
    %v956 = vunpack.c.h.b16 %v219
    %v957 = vunpack.c.l.b16 %v220
    %v958 = vunpack.c.h.b16 %v220
    %v959 = vunpack.c.l.b16 %v221
    %v960 = vunpack.c.h.b16 %v221
    %v961 = vunpack.c.l.b16 %v222
    %v962 = vunpack.c.h.b16 %v222
    %v963 = vunpack.c.l.b16 %v223
    %v964 = vunpack.c.h.b16 %v223
    %v965 = vunpack.c.l.b16 %v224
    %v966 = vunpack.c.h.b16 %v224
    %v967 = vunpack.c.l.b16 %v225
    %v968 = vunpack.c.h.b16 %v225
    %v969 = vunpack.c.l.b16 %v226
    %v970 = vunpack.c.h.b16 %v226
    %v971 = vunpack.c.l.b16 %v227
    %v972 = vunpack.c.h.b16 %v227
    %v973 = vunpack.c.l.b16 %v228
    %v974 = vunpack.c.h.b16 %v228
    %v975 = vunpack.c.l.b16 %v229
    %v976 = vunpack.c.h.b16 %v229
    %v977 = vunpack.c.l.b16 %v230
    %v978 = vunpack.c.h.b16 %v230
    %v979 = vunpack.c.l.b16 %v231
    %v980 = vunpack.c.h.b16 %v231
    %v981 = vunpack.c.l.b16 %v232
    %v982 = vunpack.c.h.b16 %v232
    %v983 = vunpack.c.l.b16 %v233
    %v984 = vunpack.c.h.b16 %v233
    %v985 = vunpack.c.l.b16 %v234
    %v986 = vunpack.c.h.b16 %v234
    %v987 = vunpack.c.l.b16 %v235
    %v988 = vunpack.c.h.b16 %v235
    %v989 = vunpack.c.l.b16 %v236
    %v990 = vunpack.c.h.b16 %v236
    %v991 = vunpack.c.l.b16 %v237
    %v992 = vunpack.c.h.b16 %v237
    %v993 = vunpack.c.l.b16 %v238
    %v994 = vunpack.c.h.b16 %v238
    %v995 = vunpack.c.l.b16 %v239
    %v996 = vunpack.c.h.b16 %v239
    %v997 = vunpack.c.l.b16 %v240
    %v998 = vunpack.c.h.b16 %v240
    %v999 = vunpack.c.l.b16 %v241
    %v1000 = vunpack.c.h.b16 %v241
    %v1001 = vunpack.c.l.b16 %v242
    %v1002 = vunpack.c.h.b16 %v242
    %v1003 = vunpack.c.l.b16 %v243
    %v1004 = vunpack.c.h.b16 %v243
    %v1005 = vunpack.c.l.b16 %v244
    %v1006 = vunpack.c.h.b16 %v244
    %v1007 = vunpack.c.l.b16 %v245
    %v1008 = vunpack.c.h.b16 %v245
    %v1009 = vunpack.c.l.b16 %v246
    %v1010 = vunpack.c.h.b16 %v246
    %v1011 = vunpack.c.l.b16 %v247
    %v1012 = vunpack.c.h.b16 %v247
    %v1013 = vunpack.c.l.b16 %v248
    %v1014 = vunpack.c.h.b16 %v248
    %v1015 = vunpack.c.l.b16 %v249
    %v1016 = vunpack.c.h.b16 %v249
    %v1017 = vunpack.c.l.b16 %v250
    %v1018 = vunpack.c.h.b16 %v250
    %v1019 = vunpack.c.l.b16 %v251
    %v1020 = vunpack.c.h.b16 %v251
    %v1021 = vunpack.c.l.b16 %v252
    %v1022 = vunpack.c.h.b16 %v252
    %v1023 = vunpack.c.l.b16 %v253
    %v1024 = vunpack.c.h.b16 %v253
    %v1025 = vunpack.c.l.b16 %v254
    %v1026 = vunpack.c.h.b16 %v254
    %v1027 = vunpack.c.l.b16 %v255
    %v1028 = vunpack.c.h.b16 %v255
    %v1029 = vunpack.c.l.b16 %v256
    %v1030 = vunpack.c.h.b16 %v256
    %v1031 = vunpack.c.l.b16 %v257
    %v1032 = vunpack.c.h.b16 %v257
    %v1033 = vunpack.c.l.b16 %v258
    %v1034 = vunpack.c.h.b16 %v258
    %v1035 = vunpack.c.l.b16 %v259
    %v1036 = vunpack.c.h.b16 %v259
    %v1037 = vunpack.c.l.b16 %v260
    %v1038 = vunpack.c.h.b16 %v260
    %v1039 = vunpack.c.l.b16 %v261
    %v1040 = vunpack.c.h.b16 %v261
    %v1041 = vunpack.c.l.b16 %v262
    %v1042 = vunpack.c.h.b16 %v262
    %v1043 = vunpack.c.l.b16 %v263
    %v1044 = vunpack.c.h.b16 %v263
    %v1045 = vunpack.c.l.b16 %v264
    %v1046 = vunpack.c.h.b16 %v264
    %v1047 = vunpack.c.l.b16 %v265
    %v1048 = vunpack.c.h.b16 %v265
    %v1049 = vunpack.c.l.b16 %v266
    %v1050 = vunpack.c.h.b16 %v266
    %v1051 = vunpack.c.l.b16 %v267
    %v1052 = vunpack.c.h.b16 %v267
    %v1053 = vunpack.c.l.b16 %v268
    %v1054 = vunpack.c.h.b16 %v268
    %v1055 = vunpack.c.l.b16 %v269
    %v1056 = vunpack.c.h.b16 %v269
    %v1057 = vunpack.c.l.b16 %v270
    %v1058 = vunpack.c.h.b16 %v270
    %v1059 = vunpack.c.l.b16 %v271
    %v1060 = vunpack.c.h.b16 %v271
    %v1061 = vunpack.c.l.b16 %v272
    %v1062 = vunpack.c.h.b16 %v272
    %v1063 = vunpack.c.l.b16 %v273
    %v1064 = vunpack.c.h.b16 %v273
    %v1065 = vunpack.c.l.b16 %v274
    %v1066 = vunpack.c.h.b16 %v274
    %v1067 = vunpack.c.l.b16 %v275
    %v1068 = vunpack.c.h.b16 %v275
    %v1069 = vunpack.c.l.b16 %v276
    %v1070 = vunpack.c.h.b16 %v276
    %v1071 = vunpack.c.l.b16 %v277
    %v1072 = vunpack.c.h.b16 %v277
    %v1073 = vunpack.c.l.b16 %v278
    %v1074 = vunpack.c.h.b16 %v278
    %v1075 = vunpack.c.l.b16 %v279
    %v1076 = vunpack.c.h.b16 %v279
    %v1077 = vunpack.c.l.b16 %v280
    %v1078 = vunpack.c.h.b16 %v280
    %v1079 = vunpack.c.l.b16 %v281
    %v1080 = vunpack.c.h.b16 %v281
    %v1081 = vunpack.c.l.b16 %v282
    %v1082 = vunpack.c.h.b16 %v282
    %v1083 = vunpack.c.l.b16 %v283
    %v1084 = vunpack.c.h.b16 %v283
    %v1085 = vunpack.c.l.b16 %v284
    %v1086 = vunpack.c.h.b16 %v284
    %v1087 = vunpack.c.l.b16 %v285
    %v1088 = vunpack.c.h.b16 %v285
    %v1089 = vunpack.c.l.b16 %v286
    %v1090 = vunpack.c.h.b16 %v286
    %v1091 = vunpack.c.l.b16 %v287
    %v1092 = vunpack.c.h.b16 %v287
    %v1093 = vunpack.c.l.b16 %v288
    %v1094 = vunpack.c.h.b16 %v288
    %v1095 = vunpack.c.l.b16 %v289
    %v1096 = vunpack.c.h.b16 %v289
    %v1097 = vunpack.c.l.b16 %v290
    %v1098 = vunpack.c.h.b16 %v290
    %v1099 = vunpack.c.l.b16 %v291
    %v1100 = vunpack.c.h.b16 %v291
    %v1101 = vunpack.c.l.b16 %v292
    %v1102 = vunpack.c.h.b16 %v292
    %v1103 = vunpack.c.l.b16 %v293
    %v1104 = vunpack.c.h.b16 %v293
    %v1105 = vunpack.c.l.b16 %v294
    %v1106 = vunpack.c.h.b16 %v294
    %v1107 = vunpack.c.l.b16 %v295
    %v1108 = vunpack.c.h.b16 %v295
    %v1109 = vunpack.c.l.b16 %v296
    %v1110 = vunpack.c.h.b16 %v296
    %v1111 = vunpack.c.l.b16 %v297
    %v1112 = vunpack.c.h.b16 %v297
    %v1113 = vunpack.c.l.b16 %v298
    %v1114 = vunpack.c.h.b16 %v298
    %v1115 = vunpack.c.l.b16 %v299
    %v1116 = vunpack.c.h.b16 %v299
    %v1117 = vunpack.c.l.b16 %v300
    %v1118 = vunpack.c.h.b16 %v300
    %v1119 = vunpack.c.l.b16 %v301
    %v1120 = vunpack.c.h.b16 %v301
    %v1121 = vunpack.c.l.b16 %v302
    %v1122 = vunpack.c.h.b16 %v302
    %v1123 = vunpack.c.l.b16 %v303
    %v1124 = vunpack.c.h.b16 %v303
    %v1125 = vunpack.c.l.b16 %v304
    %v1126 = vunpack.c.h.b16 %v304
    %v1127 = vunpack.c.l.b16 %v305
    %v1128 = vunpack.c.h.b16 %v305
    %v1129 = vunpack.c.l.b16 %v306
    %v1130 = vunpack.c.h.b16 %v306
    %v1131 = vunpack.c.l.b16 %v307
    %v1132 = vunpack.c.h.b16 %v307
    %v1133 = vunpack.c.l.b16 %v308
    %v1134 = vunpack.c.h.b16 %v308
    %v1135 = vunpack.c.l.b16 %v309
    %v1136 = vunpack.c.h.b16 %v309
    %v1137 = vunpack.c.l.b16 %v310
    %v1138 = vunpack.c.h.b16 %v310
    %v1139 = vunpack.c.l.b16 %v311
    %v1140 = vunpack.c.h.b16 %v311
    %v1141 = vunpack.c.l.b16 %v312
    %v1142 = vunpack.c.h.b16 %v312
    %v1143 = vpack.c.b16 %v635, %v631
    %v1144 = vpack.c.b16 %v636, %v632
    %v1145 = vpack.c.b16 %v637, %v633
    %v1146 = vpack.c.b16 %v638, %v634
    %v1147 = vpack.c.b16 %v643, %v639
    %v1148 = vpack.c.b16 %v644, %v640
    %v1149 = vpack.c.b16 %v645, %v641
    %v1150 = vpack.c.b16 %v646, %v642
    %v1151 = vpack.c.b16 %v651, %v647
    %v1152 = vpack.c.b16 %v652, %v648
    %v1153 = vpack.c.b16 %v653, %v649
    %v1154 = vpack.c.b16 %v654, %v650
    %v1155 = vpack.c.b16 %v659, %v655
    %v1156 = vpack.c.b16 %v660, %v656
    %v1157 = vpack.c.b16 %v661, %v657
    %v1158 = vpack.c.b16 %v662, %v658
    %v1159 = vpack.c.b16 %v667, %v663
    %v1160 = vpack.c.b16 %v668, %v664
    %v1161 = vpack.c.b16 %v669, %v665
    %v1162 = vpack.c.b16 %v670, %v666
    %v1163 = vpack.c.b16 %v675, %v671
    %v1164 = vpack.c.b16 %v676, %v672
    %v1165 = vpack.c.b16 %v677, %v673
    %v1166 = vpack.c.b16 %v678, %v674
    %v1167 = vpack.c.b16 %v683, %v679
    %v1168 = vpack.c.b16 %v684, %v680
    %v1169 = vpack.c.b16 %v685, %v681
    %v1170 = vpack.c.b16 %v686, %v682
    %v1171 = vpack.c.b16 %v691, %v687
    %v1172 = vpack.c.b16 %v692, %v688
    %v1173 = vpack.c.b16 %v693, %v689
    %v1174 = vpack.c.b16 %v694, %v690
    %v1175 = vpack.c.b16 %v699, %v695
    %v1176 = vpack.c.b16 %v700, %v696
    %v1177 = vpack.c.b16 %v701, %v697
    %v1178 = vpack.c.b16 %v702, %v698
    %v1179 = vpack.c.b16 %v707, %v703
    %v1180 = vpack.c.b16 %v708, %v704
    %v1181 = vpack.c.b16 %v709, %v705
    %v1182 = vpack.c.b16 %v710, %v706
    %v1183 = vpack.c.b16 %v715, %v711
    %v1184 = vpack.c.b16 %v716, %v712
    %v1185 = vpack.c.b16 %v717, %v713
    %v1186 = vpack.c.b16 %v718, %v714
    %v1187 = vpack.c.b16 %v723, %v719
    %v1188 = vpack.c.b16 %v724, %v720
    %v1189 = vpack.c.b16 %v725, %v721
    %v1190 = vpack.c.b16 %v726, %v722
    %v1191 = vpack.c.b16 %v731, %v727
    %v1192 = vpack.c.b16 %v732, %v728
    %v1193 = vpack.c.b16 %v733, %v729
    %v1194 = vpack.c.b16 %v734, %v730
    %v1195 = vpack.c.b16 %v739, %v735
    %v1196 = vpack.c.b16 %v740, %v736
    %v1197 = vpack.c.b16 %v741, %v737
    %v1198 = vpack.c.b16 %v742, %v738
    %v1199 = vpack.c.b16 %v747, %v743
    %v1200 = vpack.c.b16 %v748, %v744
    %v1201 = vpack.c.b16 %v749, %v745
    %v1202 = vpack.c.b16 %v750, %v746
    %v1203 = vpack.c.b16 %v755, %v751
    %v1204 = vpack.c.b16 %v756, %v752
    %v1205 = vpack.c.b16 %v757, %v753
    %v1206 = vpack.c.b16 %v758, %v754
    %v1207 = vpack.c.b16 %v763, %v759
    %v1208 = vpack.c.b16 %v764, %v760
    %v1209 = vpack.c.b16 %v765, %v761
    %v1210 = vpack.c.b16 %v766, %v762
    %v1211 = vpack.c.b16 %v771, %v767
    %v1212 = vpack.c.b16 %v772, %v768
    %v1213 = vpack.c.b16 %v773, %v769
    %v1214 = vpack.c.b16 %v774, %v770
    %v1215 = vpack.c.b16 %v779, %v775
    %v1216 = vpack.c.b16 %v780, %v776
    %v1217 = vpack.c.b16 %v781, %v777
    %v1218 = vpack.c.b16 %v782, %v778
    %v1219 = vpack.c.b16 %v787, %v783
    %v1220 = vpack.c.b16 %v788, %v784
    %v1221 = vpack.c.b16 %v789, %v785
    %v1222 = vpack.c.b16 %v790, %v786
    %v1223 = vpack.c.b16 %v795, %v791
    %v1224 = vpack.c.b16 %v796, %v792
    %v1225 = vpack.c.b16 %v797, %v793
    %v1226 = vpack.c.b16 %v798, %v794
    %v1227 = vpack.c.b16 %v803, %v799
    %v1228 = vpack.c.b16 %v804, %v800
    %v1229 = vpack.c.b16 %v805, %v801
    %v1230 = vpack.c.b16 %v806, %v802
    %v1231 = vpack.c.b16 %v811, %v807
    %v1232 = vpack.c.b16 %v812, %v808
    %v1233 = vpack.c.b16 %v813, %v809
    %v1234 = vpack.c.b16 %v814, %v810
    %v1235 = vpack.c.b16 %v819, %v815
    %v1236 = vpack.c.b16 %v820, %v816
    %v1237 = vpack.c.b16 %v821, %v817
    %v1238 = vpack.c.b16 %v822, %v818
    %v1239 = vpack.c.b16 %v827, %v823
    %v1240 = vpack.c.b16 %v828, %v824
    %v1241 = vpack.c.b16 %v829, %v825
    %v1242 = vpack.c.b16 %v830, %v826
    %v1243 = vpack.c.b16 %v835, %v831
    %v1244 = vpack.c.b16 %v836, %v832
    %v1245 = vpack.c.b16 %v837, %v833
    %v1246 = vpack.c.b16 %v838, %v834
    %v1247 = vpack.c.b16 %v843, %v839
    %v1248 = vpack.c.b16 %v844, %v840
    %v1249 = vpack.c.b16 %v845, %v841
    %v1250 = vpack.c.b16 %v846, %v842
    %v1251 = vpack.c.b16 %v851, %v847
    %v1252 = vpack.c.b16 %v852, %v848
    %v1253 = vpack.c.b16 %v853, %v849
    %v1254 = vpack.c.b16 %v854, %v850
    %v1255 = vpack.c.b16 %v859, %v855
    %v1256 = vpack.c.b16 %v860, %v856
    %v1257 = vpack.c.b16 %v861, %v857
    %v1258 = vpack.c.b16 %v862, %v858
    %v1259 = vpack.c.b16 %v867, %v863
    %v1260 = vpack.c.b16 %v868, %v864
    %v1261 = vpack.c.b16 %v869, %v865
    %v1262 = vpack.c.b16 %v870, %v866
    %v1263 = vpack.c.b16 %v875, %v871
    %v1264 = vpack.c.b16 %v876, %v872
    %v1265 = vpack.c.b16 %v877, %v873
    %v1266 = vpack.c.b16 %v878, %v874
    %v1267 = vpack.c.b16 %v883, %v879
    %v1268 = vpack.c.b16 %v884, %v880
    %v1269 = vpack.c.b16 %v885, %v881
    %v1270 = vpack.c.b16 %v886, %v882
    %v1271 = vpack.c.b16 %v891, %v887
    %v1272 = vpack.c.b16 %v892, %v888
    %v1273 = vpack.c.b16 %v893, %v889
    %v1274 = vpack.c.b16 %v894, %v890
    %v1275 = vpack.c.b16 %v899, %v895
    %v1276 = vpack.c.b16 %v900, %v896
    %v1277 = vpack.c.b16 %v901, %v897
    %v1278 = vpack.c.b16 %v902, %v898
    %v1279 = vpack.c.b16 %v907, %v903
    %v1280 = vpack.c.b16 %v908, %v904
    %v1281 = vpack.c.b16 %v909, %v905
    %v1282 = vpack.c.b16 %v910, %v906
    %v1283 = vpack.c.b16 %v915, %v911
    %v1284 = vpack.c.b16 %v916, %v912
    %v1285 = vpack.c.b16 %v917, %v913
    %v1286 = vpack.c.b16 %v918, %v914
    %v1287 = vpack.c.b16 %v923, %v919
    %v1288 = vpack.c.b16 %v924, %v920
    %v1289 = vpack.c.b16 %v925, %v921
    %v1290 = vpack.c.b16 %v926, %v922
    %v1291 = vpack.c.b16 %v931, %v927
    %v1292 = vpack.c.b16 %v932, %v928
    %v1293 = vpack.c.b16 %v933, %v929
    %v1294 = vpack.c.b16 %v934, %v930
    %v1295 = vpack.c.b16 %v939, %v935
    %v1296 = vpack.c.b16 %v940, %v936
    %v1297 = vpack.c.b16 %v941, %v937
    %v1298 = vpack.c.b16 %v942, %v938
    %v1299 = vpack.c.b16 %v947, %v943
    %v1300 = vpack.c.b16 %v948, %v944
    %v1301 = vpack.c.b16 %v949, %v945
    %v1302 = vpack.c.b16 %v950, %v946
    %v1303 = vpack.c.b16 %v955, %v951
    %v1304 = vpack.c.b16 %v956, %v952
    %v1305 = vpack.c.b16 %v957, %v953
    %v1306 = vpack.c.b16 %v958, %v954
    %v1307 = vpack.c.b16 %v963, %v959
    %v1308 = vpack.c.b16 %v964, %v960
    %v1309 = vpack.c.b16 %v965, %v961
    %v1310 = vpack.c.b16 %v966, %v962
    %v1311 = vpack.c.b16 %v971, %v967
    %v1312 = vpack.c.b16 %v972, %v968
    %v1313 = vpack.c.b16 %v973, %v969
    %v1314 = vpack.c.b16 %v974, %v970
    %v1315 = vpack.c.b16 %v979, %v975
    %v1316 = vpack.c.b16 %v980, %v976
    %v1317 = vpack.c.b16 %v981, %v977
    %v1318 = vpack.c.b16 %v982, %v978
    %v1319 = vpack.c.b16 %v987, %v983
    %v1320 = vpack.c.b16 %v988, %v984
    %v1321 = vpack.c.b16 %v989, %v985
    %v1322 = vpack.c.b16 %v990, %v986
    %v1323 = vpack.c.b16 %v995, %v991
    %v1324 = vpack.c.b16 %v996, %v992
    %v1325 = vpack.c.b16 %v997, %v993
    %v1326 = vpack.c.b16 %v998, %v994
    %v1327 = vpack.c.b16 %v1003, %v999
    %v1328 = vpack.c.b16 %v1004, %v1000
    %v1329 = vpack.c.b16 %v1005, %v1001
    %v1330 = vpack.c.b16 %v1006, %v1002
    %v1331 = vpack.c.b16 %v1011, %v1007
    %v1332 = vpack.c.b16 %v1012, %v1008
    %v1333 = vpack.c.b16 %v1013, %v1009
    %v1334 = vpack.c.b16 %v1014, %v1010
    %v1335 = vpack.c.b16 %v1019, %v1015
    %v1336 = vpack.c.b16 %v1020, %v1016
    %v1337 = vpack.c.b16 %v1021, %v1017
    %v1338 = vpack.c.b16 %v1022, %v1018
    %v1339 = vpack.c.b16 %v1027, %v1023
    %v1340 = vpack.c.b16 %v1028, %v1024
    %v1341 = vpack.c.b16 %v1029, %v1025
    %v1342 = vpack.c.b16 %v1030, %v1026
    %v1343 = vpack.c.b16 %v1035, %v1031
    %v1344 = vpack.c.b16 %v1036, %v1032
    %v1345 = vpack.c.b16 %v1037, %v1033
    %v1346 = vpack.c.b16 %v1038, %v1034
    %v1347 = vpack.c.b16 %v1043, %v1039
    %v1348 = vpack.c.b16 %v1044, %v1040
    %v1349 = vpack.c.b16 %v1045, %v1041
    %v1350 = vpack.c.b16 %v1046, %v1042
    %v1351 = vpack.c.b16 %v1051, %v1047
    %v1352 = vpack.c.b16 %v1052, %v1048
    %v1353 = vpack.c.b16 %v1053, %v1049
    %v1354 = vpack.c.b16 %v1054, %v1050
    %v1355 = vpack.c.b16 %v1059, %v1055
    %v1356 = vpack.c.b16 %v1060, %v1056
    %v1357 = vpack.c.b16 %v1061, %v1057
    %v1358 = vpack.c.b16 %v1062, %v1058
    %v1359 = vpack.c.b16 %v1067, %v1063
    %v1360 = vpack.c.b16 %v1068, %v1064
    %v1361 = vpack.c.b16 %v1069, %v1065
    %v1362 = vpack.c.b16 %v1070, %v1066
    %v1363 = vpack.c.b16 %v1075, %v1071
    %v1364 = vpack.c.b16 %v1076, %v1072
    %v1365 = vpack.c.b16 %v1077, %v1073
    %v1366 = vpack.c.b16 %v1078, %v1074
    %v1367 = vpack.c.b16 %v1083, %v1079
    %v1368 = vpack.c.b16 %v1084, %v1080
    %v1369 = vpack.c.b16 %v1085, %v1081
    %v1370 = vpack.c.b16 %v1086, %v1082
    %v1371 = vpack.c.b16 %v1091, %v1087
    %v1372 = vpack.c.b16 %v1092, %v1088
    %v1373 = vpack.c.b16 %v1093, %v1089
    %v1374 = vpack.c.b16 %v1094, %v1090
    %v1375 = vpack.c.b16 %v1099, %v1095
    %v1376 = vpack.c.b16 %v1100, %v1096
    %v1377 = vpack.c.b16 %v1101, %v1097
    %v1378 = vpack.c.b16 %v1102, %v1098
    %v1379 = vpack.c.b16 %v1107, %v1103
    %v1380 = vpack.c.b16 %v1108, %v1104
    %v1381 = vpack.c.b16 %v1109, %v1105
    %v1382 = vpack.c.b16 %v1110, %v1106
    %v1383 = vpack.c.b16 %v1115, %v1111
    %v1384 = vpack.c.b16 %v1116, %v1112
    %v1385 = vpack.c.b16 %v1117, %v1113
    %v1386 = vpack.c.b16 %v1118, %v1114
    %v1387 = vpack.c.b16 %v1123, %v1119
    %v1388 = vpack.c.b16 %v1124, %v1120
    %v1389 = vpack.c.b16 %v1125, %v1121
    %v1390 = vpack.c.b16 %v1126, %v1122
    %v1391 = vpack.c.b16 %v1131, %v1127
    %v1392 = vpack.c.b16 %v1132, %v1128
    %v1393 = vpack.c.b16 %v1133, %v1129
    %v1394 = vpack.c.b16 %v1134, %v1130
    %v1395 = vpack.c.b16 %v1139, %v1135
    %v1396 = vpack.c.b16 %v1140, %v1136
    %v1397 = vpack.c.b16 %v1141, %v1137
    %v1398 = vpack.c.b16 %v1142, %v1138
    %1655 = vmatprep.subr.bf16.mxu0 %v1144
    %1656 = vmatpush1.bf16.msra.mxu0 %v1143
    %1657 = vmatprep.subr.bf16.mxu0 %v1148
    %1658 = vmatpush1.bf16.msra.mxu0 %v1147
    %1659 = vmatprep.subr.bf16.mxu0 %v1152
    %1660 = vmatpush1.bf16.msra.mxu0 %v1151
    %1661 = vmatprep.subr.bf16.mxu0 %v1156
    %1662 = vmatpush1.bf16.msra.mxu0 %v1155
    %1663 = vmatprep.subr.bf16.mxu0 %v1160
    %1664 = vmatpush1.bf16.msra.mxu0 %v1159
    %1665 = vmatprep.subr.bf16.mxu0 %v1164
    %1666 = vmatpush1.bf16.msra.mxu0 %v1163
    %1667 = vmatprep.subr.bf16.mxu0 %v1168
    %1668 = vmatpush1.bf16.msra.mxu0 %v1167
    %1669 = vmatprep.subr.bf16.mxu0 %v1172
    %1670 = vmatpush1.bf16.msra.mxu0 %v1171
    %1671 = vmatprep.subr.bf16.mxu0 %v1176
    %1672 = vmatpush1.bf16.msra.mxu0 %v1175
    %1673 = vmatprep.subr.bf16.mxu0 %v1180
    %1674 = vmatpush1.bf16.msra.mxu0 %v1179
    %1675 = vmatprep.subr.bf16.mxu0 %v1184
    %1676 = vmatpush1.bf16.msra.mxu0 %v1183
    %1677 = vmatprep.subr.bf16.mxu0 %v1188
    %1678 = vmatpush1.bf16.msra.mxu0 %v1187
    %1679 = vmatprep.subr.bf16.mxu0 %v1192
    %1680 = vmatpush1.bf16.msra.mxu0 %v1191
    %1681 = vmatprep.subr.bf16.mxu0 %v1196
    %1682 = vmatpush1.bf16.msra.mxu0 %v1195
    %1683 = vmatprep.subr.bf16.mxu0 %v1200
    %1684 = vmatpush1.bf16.msra.mxu0 %v1199
    %1685 = vmatprep.subr.bf16.mxu0 %v1204
    %1686 = vmatpush1.bf16.msra.mxu0 %v1203
    %1687 = vmatprep.mubr.bf16.mxu0 %v360
    %1688 = vmatmul.mubr.bf16.gmra.mrb[0].mxu0 %v359
    %v1689 = vpop.f32.mrb[0].mxu0
    %v1690 = vadd.f32 %v318, %v1689
    %v1691 = vpop.f32.mrb[0].mxu0
    %v1692 = vadd.f32 %v322, %v1691
    %v1693 = vpop.f32.mrb[0].mxu0
    %v1694 = vadd.f32 %v318, %v1693
    %v1695 = vpop.f32.mrb[0].mxu0
    %v1696 = vadd.f32 %v322, %v1695
    %1697 = vdwg.mxu0
    %1698 = vmatprep.subr.bf16.mxu0 %v1208
    %1699 = vmatpush1.bf16.msra.mxu0 %v1207
    %1700 = vmatprep.subr.bf16.mxu0 %v1212
    %1701 = vmatpush1.bf16.msra.mxu0 %v1211
    %1702 = vmatprep.subr.bf16.mxu0 %v1216
    %1703 = vmatpush1.bf16.msra.mxu0 %v1215
    %1704 = vmatprep.subr.bf16.mxu0 %v1220
    %1705 = vmatpush1.bf16.msra.mxu0 %v1219
    %1706 = vmatprep.subr.bf16.mxu0 %v1224
    %1707 = vmatpush1.bf16.msra.mxu0 %v1223
    %1708 = vmatprep.subr.bf16.mxu0 %v1228
    %1709 = vmatpush1.bf16.msra.mxu0 %v1227
    %1710 = vmatprep.subr.bf16.mxu0 %v1232
    %1711 = vmatpush1.bf16.msra.mxu0 %v1231
    %1712 = vmatprep.subr.bf16.mxu0 %v1236
    %1713 = vmatpush1.bf16.msra.mxu0 %v1235
    %1714 = vmatprep.subr.bf16.mxu0 %v1240
    %1715 = vmatpush1.bf16.msra.mxu0 %v1239
    %1716 = vmatprep.subr.bf16.mxu0 %v1244
    %1717 = vmatpush1.bf16.msra.mxu0 %v1243
    %1718 = vmatprep.subr.bf16.mxu0 %v1248
    %1719 = vmatpush1.bf16.msra.mxu0 %v1247
    %1720 = vmatprep.subr.bf16.mxu0 %v1252
    %1721 = vmatpush1.bf16.msra.mxu0 %v1251
    %1722 = vmatprep.subr.bf16.mxu0 %v1256
    %1723 = vmatpush1.bf16.msra.mxu0 %v1255
    %1724 = vmatprep.subr.bf16.mxu0 %v1260
    %1725 = vmatpush1.bf16.msra.mxu0 %v1259
    %1726 = vmatprep.subr.bf16.mxu0 %v1264
    %1727 = vmatpush1.bf16.msra.mxu0 %v1263
    %1728 = vmatprep.subr.bf16.mxu0 %v1268
    %1729 = vmatpush1.bf16.msra.mxu0 %v1267
    %1730 = vmatprep.mubr.bf16.mxu0 %v362
    %1731 = vmatmul.mubr.bf16.gmra.mrb[0].mxu0 %v361
    %v1732 = vpop.f32.mrb[0].mxu0
    %v1733 = vadd.f32 %v1690, %v1732
    %v1734 = vpop.f32.mrb[0].mxu0
    %v1735 = vadd.f32 %v1692, %v1734
    %v1736 = vpop.f32.mrb[0].mxu0
    %v1737 = vadd.f32 %v1694, %v1736
    %v1738 = vpop.f32.mrb[0].mxu0
    %v1739 = vadd.f32 %v1696, %v1738
    %1740 = vdwg.mxu0
    %1741 = vmatprep.subr.bf16.mxu0 %v1272
    %1742 = vmatpush1.bf16.msra.mxu0 %v1271
    %1743 = vmatprep.subr.bf16.mxu0 %v1276
    %1744 = vmatpush1.bf16.msra.mxu0 %v1275
    %1745 = vmatprep.subr.bf16.mxu0 %v1280
    %1746 = vmatpush1.bf16.msra.mxu0 %v1279
    %1747 = vmatprep.subr.bf16.mxu0 %v1284
    %1748 = vmatpush1.bf16.msra.mxu0 %v1283
    %1749 = vmatprep.subr.bf16.mxu0 %v1288
    %1750 = vmatpush1.bf16.msra.mxu0 %v1287
    %1751 = vmatprep.subr.bf16.mxu0 %v1292
    %1752 = vmatpush1.bf16.msra.mxu0 %v1291
    %1753 = vmatprep.subr.bf16.mxu0 %v1296
    %1754 = vmatpush1.bf16.msra.mxu0 %v1295
    %1755 = vmatprep.subr.bf16.mxu0 %v1300
    %1756 = vmatpush1.bf16.msra.mxu0 %v1299
    %1757 = vmatprep.subr.bf16.mxu0 %v1304
    %1758 = vmatpush1.bf16.msra.mxu0 %v1303
    %1759 = vmatprep.subr.bf16.mxu0 %v1308
    %1760 = vmatpush1.bf16.msra.mxu0 %v1307
    %1761 = vmatprep.subr.bf16.mxu0 %v1312
    %1762 = vmatpush1.bf16.msra.mxu0 %v1311
    %1763 = vmatprep.subr.bf16.mxu0 %v1316
    %1764 = vmatpush1.bf16.msra.mxu0 %v1315
    %1765 = vmatprep.subr.bf16.mxu0 %v1320
    %1766 = vmatpush1.bf16.msra.mxu0 %v1319
    %1767 = vmatprep.subr.bf16.mxu0 %v1324
    %1768 = vmatpush1.bf16.msra.mxu0 %v1323
    %1769 = vmatprep.subr.bf16.mxu0 %v1328
    %1770 = vmatpush1.bf16.msra.mxu0 %v1327
    %1771 = vmatprep.subr.bf16.mxu0 %v1332
    %1772 = vmatpush1.bf16.msra.mxu0 %v1331
    %1773 = vmatprep.mubr.bf16.mxu0 %v364
    %1774 = vmatmul.mubr.bf16.gmra.mrb[0].mxu0 %v363
    %v1775 = vpop.f32.mrb[0].mxu0
    %v1776 = vadd.f32 %v1733, %v1775
    %v1777 = vpop.f32.mrb[0].mxu0
    %v1778 = vadd.f32 %v1735, %v1777
    %v1779 = vpop.f32.mrb[0].mxu0
    %v1780 = vadd.f32 %v1737, %v1779
    %v1781 = vpop.f32.mrb[0].mxu0
    %v1782 = vadd.f32 %v1739, %v1781
    %1783 = vdwg.mxu0
    %1784 = vmatprep.subr.bf16.mxu0 %v1336
    %1785 = vmatpush1.bf16.msra.mxu0 %v1335
    %1786 = vmatprep.subr.bf16.mxu0 %v1340
    %1787 = vmatpush1.bf16.msra.mxu0 %v1339
    %1788 = vmatprep.subr.bf16.mxu0 %v1344
    %1789 = vmatpush1.bf16.msra.mxu0 %v1343
    %1790 = vmatprep.subr.bf16.mxu0 %v1348
    %1791 = vmatpush1.bf16.msra.mxu0 %v1347
    %1792 = vmatprep.subr.bf16.mxu0 %v1352
    %1793 = vmatpush1.bf16.msra.mxu0 %v1351
    %1794 = vmatprep.subr.bf16.mxu0 %v1356
    %1795 = vmatpush1.bf16.msra.mxu0 %v1355
    %1796 = vmatprep.subr.bf16.mxu0 %v1360
    %1797 = vmatpush1.bf16.msra.mxu0 %v1359
    %1798 = vmatprep.subr.bf16.mxu0 %v1364
    %1799 = vmatpush1.bf16.msra.mxu0 %v1363
    %1800 = vmatprep.subr.bf16.mxu0 %v1368
    %1801 = vmatpush1.bf16.msra.mxu0 %v1367
    %1802 = vmatprep.subr.bf16.mxu0 %v1372
    %1803 = vmatpush1.bf16.msra.mxu0 %v1371
    %1804 = vmatprep.subr.bf16.mxu0 %v1376
    %1805 = vmatpush1.bf16.msra.mxu0 %v1375
    %1806 = vmatprep.subr.bf16.mxu0 %v1380
    %1807 = vmatpush1.bf16.msra.mxu0 %v1379
    %1808 = vmatprep.subr.bf16.mxu0 %v1384
    %1809 = vmatpush1.bf16.msra.mxu0 %v1383
    %1810 = vmatprep.subr.bf16.mxu0 %v1388
    %1811 = vmatpush1.bf16.msra.mxu0 %v1387
    %1812 = vmatprep.subr.bf16.mxu0 %v1392
    %1813 = vmatpush1.bf16.msra.mxu0 %v1391
    %1814 = vmatprep.subr.bf16.mxu0 %v1396
    %1815 = vmatpush1.bf16.msra.mxu0 %v1395
    %1816 = vmatprep.mubr.bf16.mxu0 %v366
    %1817 = vmatmul.mubr.bf16.gmra.mrb[0].mxu0 %v365
    %v1818 = vpop.f32.mrb[0].mxu0
    %v1819 = vadd.f32 %v1776, %v1818
    %v1820 = vpop.f32.mrb[0].mxu0
    %v1821 = vadd.f32 %v1778, %v1820
    %v1822 = vpop.f32.mrb[0].mxu0
    %v1823 = vadd.f32 %v1780, %v1822
    %v1824 = vpop.f32.mrb[0].mxu0
    %v1825 = vadd.f32 %v1782, %v1824
    %1826 = vdwg.mxu0
    %1827 = vmatprep.subr.bf16.mxu0 %v1146
    %1828 = vmatpush1.bf16.msra.mxu0 %v1145
    %1829 = vmatprep.subr.bf16.mxu0 %v1150
    %1830 = vmatpush1.bf16.msra.mxu0 %v1149
    %1831 = vmatprep.subr.bf16.mxu0 %v1154
    %1832 = vmatpush1.bf16.msra.mxu0 %v1153
    %1833 = vmatprep.subr.bf16.mxu0 %v1158
    %1834 = vmatpush1.bf16.msra.mxu0 %v1157
    %1835 = vmatprep.subr.bf16.mxu0 %v1162
    %1836 = vmatpush1.bf16.msra.mxu0 %v1161
    %1837 = vmatprep.subr.bf16.mxu0 %v1166
    %1838 = vmatpush1.bf16.msra.mxu0 %v1165
    %1839 = vmatprep.subr.bf16.mxu0 %v1170
    %1840 = vmatpush1.bf16.msra.mxu0 %v1169
    %1841 = vmatprep.subr.bf16.mxu0 %v1174
    %1842 = vmatpush1.bf16.msra.mxu0 %v1173
    %1843 = vmatprep.subr.bf16.mxu0 %v1178
    %1844 = vmatpush1.bf16.msra.mxu0 %v1177
    %1845 = vmatprep.subr.bf16.mxu0 %v1182
    %1846 = vmatpush1.bf16.msra.mxu0 %v1181
    %1847 = vmatprep.subr.bf16.mxu0 %v1186
    %1848 = vmatpush1.bf16.msra.mxu0 %v1185
    %1849 = vmatprep.subr.bf16.mxu0 %v1190
    %1850 = vmatpush1.bf16.msra.mxu0 %v1189
    %1851 = vmatprep.subr.bf16.mxu0 %v1194
    %1852 = vmatpush1.bf16.msra.mxu0 %v1193
    %1853 = vmatprep.subr.bf16.mxu0 %v1198
    %1854 = vmatpush1.bf16.msra.mxu0 %v1197
    %1855 = vmatprep.subr.bf16.mxu0 %v1202
    %1856 = vmatpush1.bf16.msra.mxu0 %v1201
    %1857 = vmatprep.subr.bf16.mxu0 %v1206
    %1858 = vmatpush1.bf16.msra.mxu0 %v1205
    %1859 = vmatprep.mubr.bf16.mxu0 %v360
    %1860 = vmatmul.mubr.bf16.gmra.mrb[0].mxu0 %v359
    %v1861 = vpop.f32.mrb[0].mxu0
    %v1862 = vadd.f32 %v326, %v1861
    %v1863 = vpop.f32.mrb[0].mxu0
    %v1864 = vadd.f32 %v330, %v1863
    %v1865 = vpop.f32.mrb[0].mxu0
    %v1866 = vadd.f32 %v326, %v1865
    %v1867 = vpop.f32.mrb[0].mxu0
    %v1868 = vadd.f32 %v330, %v1867
    %1869 = vdwg.mxu0
    %1870 = vmatprep.subr.bf16.mxu0 %v1210
    %1871 = vmatpush1.bf16.msra.mxu0 %v1209
    %1872 = vmatprep.subr.bf16.mxu0 %v1214
    %1873 = vmatpush1.bf16.msra.mxu0 %v1213
    %1874 = vmatprep.subr.bf16.mxu0 %v1218
    %1875 = vmatpush1.bf16.msra.mxu0 %v1217
    %1876 = vmatprep.subr.bf16.mxu0 %v1222
    %1877 = vmatpush1.bf16.msra.mxu0 %v1221
    %1878 = vmatprep.subr.bf16.mxu0 %v1226
    %1879 = vmatpush1.bf16.msra.mxu0 %v1225
    %1880 = vmatprep.subr.bf16.mxu0 %v1230
    %1881 = vmatpush1.bf16.msra.mxu0 %v1229
    %1882 = vmatprep.subr.bf16.mxu0 %v1234
    %1883 = vmatpush1.bf16.msra.mxu0 %v1233
    %1884 = vmatprep.subr.bf16.mxu0 %v1238
    %1885 = vmatpush1.bf16.msra.mxu0 %v1237
    %1886 = vmatprep.subr.bf16.mxu0 %v1242
    %1887 = vmatpush1.bf16.msra.mxu0 %v1241
    %1888 = vmatprep.subr.bf16.mxu0 %v1246
    %1889 = vmatpush1.bf16.msra.mxu0 %v1245
    %1890 = vmatprep.subr.bf16.mxu0 %v1250
    %1891 = vmatpush1.bf16.msra.mxu0 %v1249
    %1892 = vmatprep.subr.bf16.mxu0 %v1254
    %1893 = vmatpush1.bf16.msra.mxu0 %v1253
    %1894 = vmatprep.subr.bf16.mxu0 %v1258
    %1895 = vmatpush1.bf16.msra.mxu0 %v1257
    %1896 = vmatprep.subr.bf16.mxu0 %v1262
    %1897 = vmatpush1.bf16.msra.mxu0 %v1261
    %1898 = vmatprep.subr.bf16.mxu0 %v1266
    %1899 = vmatpush1.bf16.msra.mxu0 %v1265
    %1900 = vmatprep.subr.bf16.mxu0 %v1270
    %1901 = vmatpush1.bf16.msra.mxu0 %v1269
    %1902 = vmatprep.mubr.bf16.mxu0 %v362
    %1903 = vmatmul.mubr.bf16.gmra.mrb[0].mxu0 %v361
    %v1904 = vpop.f32.mrb[0].mxu0
    %v1905 = vadd.f32 %v1862, %v1904
    %v1906 = vpop.f32.mrb[0].mxu0
    %v1907 = vadd.f32 %v1864, %v1906
    %v1908 = vpop.f32.mrb[0].mxu0
    %v1909 = vadd.f32 %v1866, %v1908
    %v1910 = vpop.f32.mrb[0].mxu0
    %v1911 = vadd.f32 %v1868, %v1910
    %1912 = vdwg.mxu0
    %1913 = vmatprep.subr.bf16.mxu0 %v1274
    %1914 = vmatpush1.bf16.msra.mxu0 %v1273
    %1915 = vmatprep.subr.bf16.mxu0 %v1278
    %1916 = vmatpush1.bf16.msra.mxu0 %v1277
    %1917 = vmatprep.subr.bf16.mxu0 %v1282
    %1918 = vmatpush1.bf16.msra.mxu0 %v1281
    %1919 = vmatprep.subr.bf16.mxu0 %v1286
    %1920 = vmatpush1.bf16.msra.mxu0 %v1285
    %1921 = vmatprep.subr.bf16.mxu0 %v1290
    %1922 = vmatpush1.bf16.msra.mxu0 %v1289
    %1923 = vmatprep.subr.bf16.mxu0 %v1294
    %1924 = vmatpush1.bf16.msra.mxu0 %v1293
    %1925 = vmatprep.subr.bf16.mxu0 %v1298
    %1926 = vmatpush1.bf16.msra.mxu0 %v1297
    %1927 = vmatprep.subr.bf16.mxu0 %v1302
    %1928 = vmatpush1.bf16.msra.mxu0 %v1301
    %1929 = vmatprep.subr.bf16.mxu0 %v1306
    %1930 = vmatpush1.bf16.msra.mxu0 %v1305
    %1931 = vmatprep.subr.bf16.mxu0 %v1310
    %1932 = vmatpush1.bf16.msra.mxu0 %v1309
    %1933 = vmatprep.subr.bf16.mxu0 %v1314
    %1934 = vmatpush1.bf16.msra.mxu0 %v1313
    %1935 = vmatprep.subr.bf16.mxu0 %v1318
    %1936 = vmatpush1.bf16.msra.mxu0 %v1317
    %1937 = vmatprep.subr.bf16.mxu0 %v1322
    %1938 = vmatpush1.bf16.msra.mxu0 %v1321
    %1939 = vmatprep.subr.bf16.mxu0 %v1326
    %1940 = vmatpush1.bf16.msra.mxu0 %v1325
    %1941 = vmatprep.subr.bf16.mxu0 %v1330
    %1942 = vmatpush1.bf16.msra.mxu0 %v1329
    %1943 = vmatprep.subr.bf16.mxu0 %v1334
    %1944 = vmatpush1.bf16.msra.mxu0 %v1333
    %1945 = vmatprep.mubr.bf16.mxu0 %v364
    %1946 = vmatmul.mubr.bf16.gmra.mrb[0].mxu0 %v363
    %v1947 = vpop.f32.mrb[0].mxu0
    %v1948 = vadd.f32 %v1905, %v1947
    %v1949 = vpop.f32.mrb[0].mxu0
    %v1950 = vadd.f32 %v1907, %v1949
    %v1951 = vpop.f32.mrb[0].mxu0
    %v1952 = vadd.f32 %v1909, %v1951
    %v1953 = vpop.f32.mrb[0].mxu0
    %v1954 = vadd.f32 %v1911, %v1953
    %1955 = vdwg.mxu0
    %1956 = vmatprep.subr.bf16.mxu0 %v1338
    %1957 = vmatpush1.bf16.msra.mxu0 %v1337
    %1958 = vmatprep.subr.bf16.mxu0 %v1342
    %1959 = vmatpush1.bf16.msra.mxu0 %v1341
    %1960 = vmatprep.subr.bf16.mxu0 %v1346
    %1961 = vmatpush1.bf16.msra.mxu0 %v1345
    %1962 = vmatprep.subr.bf16.mxu0 %v1350
    %1963 = vmatpush1.bf16.msra.mxu0 %v1349
    %1964 = vmatprep.subr.bf16.mxu0 %v1354
    %1965 = vmatpush1.bf16.msra.mxu0 %v1353
    %1966 = vmatprep.subr.bf16.mxu0 %v1358
    %1967 = vmatpush1.bf16.msra.mxu0 %v1357
    %1968 = vmatprep.subr.bf16.mxu0 %v1362
    %1969 = vmatpush1.bf16.msra.mxu0 %v1361
    %1970 = vmatprep.subr.bf16.mxu0 %v1366
    %1971 = vmatpush1.bf16.msra.mxu0 %v1365
    %1972 = vmatprep.subr.bf16.mxu0 %v1370
    %1973 = vmatpush1.bf16.msra.mxu0 %v1369
    %1974 = vmatprep.subr.bf16.mxu0 %v1374
    %1975 = vmatpush1.bf16.msra.mxu0 %v1373
    %1976 = vmatprep.subr.bf16.mxu0 %v1378
    %1977 = vmatpush1.bf16.msra.mxu0 %v1377
    %1978 = vmatprep.subr.bf16.mxu0 %v1382
    %1979 = vmatpush1.bf16.msra.mxu0 %v1381
    %1980 = vmatprep.subr.bf16.mxu0 %v1386
    %1981 = vmatpush1.bf16.msra.mxu0 %v1385
    %1982 = vmatprep.subr.bf16.mxu0 %v1390
    %1983 = vmatpush1.bf16.msra.mxu0 %v1389
    %1984 = vmatprep.subr.bf16.mxu0 %v1394
    %1985 = vmatpush1.bf16.msra.mxu0 %v1393
    %1986 = vmatprep.subr.bf16.mxu0 %v1398
    %1987 = vmatpush1.bf16.msra.mxu0 %v1397
    %1988 = vmatprep.mubr.bf16.mxu0 %v366
    %1989 = vmatmul.mubr.bf16.gmra.mrb[0].mxu0 %v365
    %v1990 = vpop.f32.mrb[0].mxu0
    %v1991 = vadd.f32 %v1948, %v1990
    %v1992 = vpop.f32.mrb[0].mxu0
    %v1993 = vadd.f32 %v1950, %v1992
    %v1994 = vpop.f32.mrb[0].mxu0
    %v1995 = vadd.f32 %v1952, %v1994
    %v1996 = vpop.f32.mrb[0].mxu0
    %v1997 = vadd.f32 %v1954, %v1996
    %1998 = vdwg.mxu0
    %v1999 = vmax.f32 %v1819, 0.0
    %v2000 = vmax.f32 %v1821, 0.0
    %v2001 = vmax.f32 %v1991, 0.0
    %v2002 = vmax.f32 %v1993, 0.0
    %v2003 = vmax.f32 %v1823, 0.0
    %v2004 = vmax.f32 %v1825, 0.0
    %v2005 = vmax.f32 %v1995, 0.0
    %v2006 = vmax.f32 %v1997, 0.0
    %v2007 = vld [vmem:[%s3] sm:$0xf]
    %v2009 = vlaneseq
    %v2010 = vshrl.u32 %v2009, 7
    %v2011 = vsub.s32 0, %v2010
    %v2012 = vrot.slane %v2007, %v2011
    %v2013 = vlaneseq
    %v2014 = vshrl.u32 %v2013, 7
    %v2015 = vsub.s32 1, %v2014
    %v2016 = vrot.slane %v2007, %v2015
    %v2017 = vlaneseq
    %v2018 = vshrl.u32 %v2017, 7
    %v2019 = vsub.s32 2, %v2018
    %v2020 = vrot.slane %v2007, %v2019
    %v2021 = vlaneseq
    %v2022 = vshrl.u32 %v2021, 7
    %v2023 = vsub.s32 3, %v2022
    %v2024 = vrot.slane %v2007, %v2023
    %v2029 = vmul.f32 %v1999, %v2012
    %v2030 = vmul.f32 %v2000, %v2016
    %v2031 = vmul.f32 %v2001, %v2020
    %v2032 = vmul.f32 %v2002, %v2024
    %v2033 = vmul.f32 %v2003, %v2012
    %v2034 = vmul.f32 %v2004, %v2016
    %v2035 = vmul.f32 %v2005, %v2020
    %v2036 = vmul.f32 %v2006, %v2024
    %v2037 = vadd.f32 %v2029, %v2030
    %v2038 = vadd.f32 %v2037, %v2031
    %v2039 = vadd.f32 %v2038, %v2032
    %2040 = vadd.xlane.f32.xlu0 %v2039
    %v2041 = vpop.xlane.xlu0 %2040
    %v2042 = vadd.f32 %v2033, %v2034
    %v2043 = vadd.f32 %v2042, %v2035
    %v2044 = vadd.f32 %v2043, %v2036
    %2045 = vadd.xlane.f32.xlu0 %v2044
    %v2046 = vpop.xlane.xlu0 %2045
    %s2047 = sld [smem:[#allocation2]]
    %v2048 = vstv %s2047
    %v2049 = vadd.f32 %v2041, %v2048
    %v2050 = vadd.f32 %v2046, %v2048
    %vm2051 = vcmask 7168
    %2052 = vst.msk [vmem:[%s5] sm:$0xff] %vm2051, %v2049
    %2053 = vst.msk [vmem:[%s5 + $0x8] sm:$0xff] %vm2051, %v2050
    // Predicated region
    $region30: #{tpu_custom_call.1} parent=1 // pred_check
      _
    $region31: #{tpu_custom_call.1} parent=1 // pred_check_branch
      %2055 = sbr.rel (0) target = $region33
    $region32: #{tpu_custom_call.1} parent=1 // pred_region
      _
    $region33: #{tpu_custom_call.1} parent=1 // pred_fallthru
      _
    // Predicated region
    $region34: #{tpu_custom_call.1} parent=1 // pred_check
      _
    $region35: #{tpu_custom_call.1} parent=1 // pred_check_branch
      %2057 = sbr.rel (0) target = $region37
    $region36: #{tpu_custom_call.1} parent=1 // pred_region
      _
    $region37: #{tpu_custom_call.1} parent=1 // pred_fallthru
      _
    %2058 = vsyncpa [#allocation4], 1
    %2059 = vsyncpa [#allocation6], 1

</llo_original>
